<compile_context>
chip_gen: v6e
topology: v6e:2x2x1
jax: 0.10.0
libtpu: 0.0.40
codegen_flags: <defaults>
</compile_context>

<pallas_src>
import jax
import jax.numpy as jnp
from jax import lax
from jax.experimental import pallas as pl
from jax.experimental.pallas import tpu as pltpu


# ------------------------------------------------------------------ kernel ---

def _gconv_stack_kernel(
        # edge / pooling inputs (layer-invariant, stay resident in VMEM)
        s_col_ref, o_col_ref, s_row_ref, o_row_ref, inv_cnt_ref,
        # initial node / predicate features
        obj_in_ref, pred_in_ref,
        # per-layer weights (leading layer axis selected by the grid)
        w1s_ref, w1p_ref, w1o_ref, b1_ref,
        w2s_ref, w2p_ref, w2o_ref, b2s_ref, b2p_ref, b2o_ref,
        w3_ref, b3_ref, w4_ref, b4_ref,
        # outputs (constant index_map -> resident across the layer grid)
        obj_out_ref, pred_out_ref,
        # VMEM state carried across layers
        obj_state, pred_state):
    layer = pl.program_id(0)
    f32 = jnp.float32
    bf16 = jnp.bfloat16

    # Layer 0: seed the resident VMEM state from the inputs.
    @pl.when(layer == 0)
    def _():
        obj_state[...] = obj_in_ref[...]
        pred_state[...] = pred_in_ref[...]

    obj = obj_state[...]                       # (O, Din) f32
    pred = pred_state[...]                     # (T, Din) f32
    O = obj.shape[0]
    T = pred.shape[0]

    # Edge one-hots, built directly in BOTH orientations (no transposes):
    #   gather  (T, O): row t has a 1 at column s_idx[t] / o_idx[t]
    #   scatter (O, T): column t has a 1 at row   s_idx[t] / o_idx[t]
    iota_g = lax.broadcasted_iota(jnp.int32, (T, O), 1)
    s_gat = (iota_g == s_col_ref[...]).astype(f32)          # (T, O)
    o_gat = (iota_g == o_col_ref[...]).astype(f32)          # (T, O)
    iota_s = lax.broadcasted_iota(jnp.int32, (O, T), 0)
    s_sct = (iota_s == s_row_ref[...]).astype(f32)          # (O, T)
    o_sct = (iota_s == o_row_ref[...]).astype(f32)          # (O, T)

    # --- net1, first Linear + ReLU ------------------------------------------
    # h1 = relu(obj[s] @ W1s + pred @ W1p + obj[o] @ W1o + b1)
    #    = relu(s_gat @ (obj @ W1s) + pred @ W1p + o_gat @ (obj @ W1o) + b1)
    # Projecting the O objects once costs O*Din*H instead of T*Din*H per stream
    # and removes the (T, 3*Din) concat buffer.
    obj_b = obj.astype(bf16)
    proj_s = jnp.dot(obj_b, w1s_ref[0], preferred_element_type=f32)      # (O, H)
    proj_o = jnp.dot(obj_b, w1o_ref[0], preferred_element_type=f32)      # (O, H)
    proj_p = jnp.dot(pred.astype(bf16), w1p_ref[0],
                     preferred_element_type=f32)                         # (T, H)

    h1 = (jnp.dot(s_gat, proj_s, preferred_element_type=f32)
          + proj_p
          + jnp.dot(o_gat, proj_o, preferred_element_type=f32)
          + b1_ref[0])
    h1 = jnp.maximum(h1, 0.0)                                            # (T, H)
    h1_b = h1.astype(bf16)

    # --- net1, second Linear + ReLU (split weights -> lane-dense outputs) ---
    new_s = jnp.maximum(
        jnp.dot(h1_b, w2s_ref[0], preferred_element_type=f32) + b2s_ref[0], 0.0)
    new_p = jnp.maximum(
        jnp.dot(h1_b, w2p_ref[0], preferred_element_type=f32) + b2p_ref[0], 0.0)
    new_o = jnp.maximum(
        jnp.dot(h1_b, w2o_ref[0], preferred_element_type=f32) + b2o_ref[0], 0.0)

    # --- scatter-add over objects + 'avg' pooling ----------------------------
    pooled = (jnp.dot(s_sct, new_s, preferred_element_type=f32)
              + jnp.dot(o_sct, new_o, preferred_element_type=f32))       # (O, H)
    pooled = pooled * inv_cnt_ref[...]          # 1/clamp(counts,1), precomputed

    # --- net2: Linear + ReLU, Linear + ReLU ----------------------------------
    h3 = jnp.maximum(
        jnp.dot(pooled.astype(bf16), w3_ref[0], preferred_element_type=f32)
        + b3_ref[0], 0.0)                                                # (O, H)
    new_obj = jnp.maximum(
        jnp.dot(h3.astype(bf16), w4_ref[0], preferred_element_type=f32)
        + b4_ref[0], 0.0)                                                # (O, Dout)

    # Carry state to the next layer; stage outputs (blocks stay resident in
    # VMEM across the whole grid, only the final values land in HBM).
    obj_state[...] = new_obj
    pred_state[...] = new_p
    obj_out_ref[...] = new_obj
    pred_out_ref[...] = new_p


# ----------------------------------------------------------------- wrapper ---

def _const_spec(shape):
    # Whole array as one VMEM block, same block for every grid step.
    return pl.BlockSpec(shape, lambda l: (0,) * len(shape))


def _layer_spec(shape):
    # Leading axis = layer index, selected by the grid; rest is one block.
    return pl.BlockSpec((1,) + tuple(shape[1:]),
                        lambda l: (l,) + (0,) * (len(shape) - 1))


def pack_params(all_params, Din, H, Dout):
    """Split/stack per-layer (w1,b1,w2,b2,w3,b3,w4,b4) for the fused kernel."""
    wdt = jnp.bfloat16

    def stack(fn):
        return jnp.stack([fn(p) for p in all_params], axis=0)

    return dict(
        w1s=stack(lambda p: p[0][:Din].astype(wdt)),          # (L, Din, H)
        w1p=stack(lambda p: p[0][Din:2 * Din].astype(wdt)),   # (L, Din, H)
        w1o=stack(lambda p: p[0][2 * Din:].astype(wdt)),      # (L, Din, H)
        b1=stack(lambda p: p[1]),                             # (L, 1, H) f32
        w2s=stack(lambda p: p[2][:, :H].astype(wdt)),         # (L, H, H)
        w2p=stack(lambda p: p[2][:, H:H + Dout].astype(wdt)), # (L, H, Dout)
        w2o=stack(lambda p: p[2][:, H + Dout:].astype(wdt)),  # (L, H, H)
        b2s=stack(lambda p: p[3][:, :H]),                     # (L, 1, H)
        b2p=stack(lambda p: p[3][:, H:H + Dout]),             # (L, 1, Dout)
        b2o=stack(lambda p: p[3][:, H + Dout:]),              # (L, 1, H)
        w3=stack(lambda p: p[4].astype(wdt)),                 # (L, H, H)
        b3=stack(lambda p: p[5]),                             # (L, 1, H)
        w4=stack(lambda p: p[6].astype(wdt)),                 # (L, H, Dout)
        b4=stack(lambda p: p[7]),                             # (L, 1, Dout)
    )


def graph_triple_conv_net(obj_vecs, pred_vecs, edges, packed, H, Dout):
    """GraphTripleConvNet.forward: all layers fused into one pallas_call."""
    O, Din = obj_vecs.shape
    T = pred_vecs.shape[0]
    L = packed["w1s"].shape[0]
    # In the stacked net each layer's output feeds the next layer's input, so
    # Dout == Din (as in the PyTorch module, where output_dim defaults to input_dim).
    assert Dout == Din

    edges = edges.astype(jnp.int32)
    s_col = edges[:, 0:1]                       # (T, 1)
    o_col = edges[:, 1:2]                       # (T, 1)
    s_row = edges[:, 0].reshape(1, T)           # (1, T)
    o_row = edges[:, 1].reshape(1, T)           # (1, T)

    # 'avg' pooling denominators depend only on `edges`; compute once per forward.
    counts = (jnp.zeros((O,), jnp.float32)
              .at[edges[:, 0]].add(1.0)
              .at[edges[:, 1]].add(1.0))
    inv_cnt = (1.0 / jnp.maximum(counts, 1.0)).reshape(O, 1)

    inputs = (s_col, o_col, s_row, o_row, inv_cnt,
              obj_vecs, pred_vecs,
              packed["w1s"], packed["w1p"], packed["w1o"], packed["b1"],
              packed["w2s"], packed["w2p"], packed["w2o"],
              packed["b2s"], packed["b2p"], packed["b2o"],
              packed["w3"], packed["b3"], packed["w4"], packed["b4"])
    in_specs = ([_const_spec(x.shape) for x in inputs[:7]]
                + [_layer_spec(x.shape) for x in inputs[7:]])

    new_obj, new_pred = pl.pallas_call(
        _gconv_stack_kernel,
        grid=(L,),
        in_specs=in_specs,
        out_specs=(_const_spec((O, Dout)), _const_spec((T, Dout))),
        out_shape=(jax.ShapeDtypeStruct((O, Dout), jnp.float32),
                   jax.ShapeDtypeStruct((T, Dout), jnp.float32)),
        scratch_shapes=[pltpu.VMEM((O, Din), jnp.float32),
                        pltpu.VMEM((T, Din), jnp.float32)],
        compiler_params=pltpu.CompilerParams(
            dimension_semantics=("arbitrary",)),   # layers are sequential
    )(*inputs)
    return new_obj, new_pred


# ------------------------------------------------------------------ params ---

def init_params(key, num_layers, Din, H, Dout):
    """Deterministic Kaiming-normal-ish init matching the module's shapes (f32)."""
    all_params = []
    for layer in range(num_layers):
        ks = jax.random.split(jax.random.fold_in(key, layer), 4)

        def kaiming(k, fan_in, shape):
            return (jax.random.normal(k, shape, jnp.float32)
                    * jnp.sqrt(2.0 / fan_in))

        # net1: [3*Din -> H -> 2H+Dout]
        w1 = kaiming(ks[0], 3 * Din, (3 * Din, H))
        b1 = jnp.zeros((1, H), jnp.float32)
        w2 = kaiming(ks[1], H, (H, 2 * H + Dout))
        b2 = jnp.zeros((1, 2 * H + Dout), jnp.float32)
        # net2: [H -> H -> Dout]
        w3 = kaiming(ks[2], H, (H, H))
        b3 = jnp.zeros((1, H), jnp.float32)
        w4 = kaiming(ks[3], H, (H, Dout))
        b4 = jnp.zeros((1, Dout), jnp.float32)
        all_params.append((w1, b1, w2, b2, w3, b3, w4, b4))
    return all_params


# --------------------------------------------------------------- reference ---

def reference_net(obj, pred, edges, all_params, H, Dout):
    """Pure-JAX f32 reference (gather / scatter_add), mirrors the PyTorch forward."""
    for (w1, b1, w2, b2, w3, b3, w4, b4) in all_params:
        s = edges[:, 0]
        o = edges[:, 1]
        t = jnp.concatenate([obj[s], pred, obj[o]], axis=1)
        h1 = jax.nn.relu(t @ w1 + b1)
        h2 = jax.nn.relu(h1 @ w2 + b2)
        new_s = h2[:, :H]
        new_p = h2[:, H:H + Dout]
        new_o = h2[:, H + Dout:]
        O = obj.shape[0]
        pooled = jnp.zeros((O, H), jnp.float32).at[s].add(new_s).at[o].add(new_o)
        counts = jnp.zeros((O,), jnp.float32).at[s].add(1.0).at[o].add(1.0)
        counts = jnp.maximum(counts, 1.0)
        pooled = pooled / counts[:, None]
        h3 = jax.nn.relu(pooled @ w3 + b3)
        obj = jax.nn.relu(h3 @ w4 + b4)
        pred = new_p
    return obj, pred


# -------------------------------------------------------------------- main ---

if __name__ == "__main__":
    # Small shapes consistent with the module: O objects, T triples,
    # input_dim = Din, hidden_dim = H, output_dim = Dout = Din.
    O, T = 8, 16
    Din = 128
    H = 128
    Dout = Din
    num_layers = 2

    key = jax.random.PRNGKey(0)
    k_obj, k_pred, k_edge, k_par = jax.random.split(key, 4)

    obj_vecs = jax.random.normal(k_obj, (O, Din), jnp.float32)
    pred_vecs = jax.random.normal(k_pred, (T, Din), jnp.float32)
    edges = jax.random.randint(k_edge, (T, 2), 0, O, dtype=jnp.int32)

    all_params = init_params(k_par, num_layers, Din, H, Dout)
    packed = pack_params(all_params, Din, H, Dout)

    new_obj, new_pred = graph_triple_conv_net(obj_vecs, pred_vecs, edges,
                                              packed, H, Dout)
    jax.block_until_ready((new_obj, new_pred))

    ref_obj, ref_pred = reference_net(obj_vecs, pred_vecs, edges,
                                      all_params, H, Dout)
    assert new_obj.shape == (O, Dout) and new_pred.shape == (T, Dout)

    # Kernel uses bf16 MXU operands (f32 accumulation) for the heavy matmuls,
    # so compare with a normalized max-error check robust to near-zero elements.
    def max_rel_err(x, ref):
        return float(jnp.max(jnp.abs(x - ref)) / (jnp.max(jnp.abs(ref)) + 1e-8))

    assert max_rel_err(new_obj, ref_obj) < 2e-2
    assert max_rel_err(new_pred, ref_pred) < 2e-2

    print("KERNEL_OK")
</pallas_src>

<mosaic_0001>
module attributes {stable_mosaic.version = 11 : i64} {
  func.func @_gconv_stack_kernel(%arg0: i32, %arg1: memref<16x1xi32, #tpu.memory_space<vmem>>, %arg2: memref<16x1xi32, #tpu.memory_space<vmem>>, %arg3: memref<1x16xi32, #tpu.memory_space<vmem>>, %arg4: memref<1x16xi32, #tpu.memory_space<vmem>>, %arg5: memref<8x1xf32, #tpu.memory_space<vmem>>, %arg6: memref<8x128xf32, #tpu.memory_space<vmem>>, %arg7: memref<16x128xf32, #tpu.memory_space<vmem>>, %arg8: memref<1x128x128xbf16, #tpu.memory_space<vmem>>, %arg9: memref<1x128x128xbf16, #tpu.memory_space<vmem>>, %arg10: memref<1x128x128xbf16, #tpu.memory_space<vmem>>, %arg11: memref<1x1x128xf32, #tpu.memory_space<vmem>>, %arg12: memref<1x128x128xbf16, #tpu.memory_space<vmem>>, %arg13: memref<1x128x128xbf16, #tpu.memory_space<vmem>>, %arg14: memref<1x128x128xbf16, #tpu.memory_space<vmem>>, %arg15: memref<1x1x128xf32, #tpu.memory_space<vmem>>, %arg16: memref<1x1x128xf32, #tpu.memory_space<vmem>>, %arg17: memref<1x1x128xf32, #tpu.memory_space<vmem>>, %arg18: memref<1x128x128xbf16, #tpu.memory_space<vmem>>, %arg19: memref<1x1x128xf32, #tpu.memory_space<vmem>>, %arg20: memref<1x128x128xbf16, #tpu.memory_space<vmem>>, %arg21: memref<1x1x128xf32, #tpu.memory_space<vmem>>, %arg22: memref<8x128xf32, #tpu.memory_space<vmem>>, %arg23: memref<16x128xf32, #tpu.memory_space<vmem>>, %arg24: memref<8x128xf32, #tpu.memory_space<vmem>>, %arg25: memref<16x128xf32, #tpu.memory_space<vmem>>) attributes {dimension_semantics = [#tpu.dimension_semantics<arbitrary>], iteration_bounds = array<i64: 2>, scalar_prefetch = 0 : i64, scratch_operands = 2 : i64, tpu.core_type = #tpu.core_type<tc>, window_params = [{pipeline_mode = #tpu.pipeline_mode<synchronous>, transform_indices = @transform_0, window_bounds = array<i64: 16, 1>}, {pipeline_mode = #tpu.pipeline_mode<synchronous>, transform_indices = @transform_1, window_bounds = array<i64: 16, 1>}, {pipeline_mode = #tpu.pipeline_mode<synchronous>, transform_indices = @transform_2, window_bounds = array<i64: 1, 16>}, {pipeline_mode = #tpu.pipeline_mode<synchronous>, transform_indices = @transform_3, window_bounds = array<i64: 1, 16>}, {pipeline_mode = #tpu.pipeline_mode<synchronous>, transform_indices = @transform_4, window_bounds = array<i64: 8, 1>}, {pipeline_mode = #tpu.pipeline_mode<synchronous>, transform_indices = @transform_5, window_bounds = array<i64: 8, 128>}, {pipeline_mode = #tpu.pipeline_mode<synchronous>, transform_indices = @transform_6, window_bounds = array<i64: 16, 128>}, {transform_indices = @transform_7, window_bounds = array<i64: 1, 128, 128>}, {transform_indices = @transform_8, window_bounds = array<i64: 1, 128, 128>}, {transform_indices = @transform_9, window_bounds = array<i64: 1, 128, 128>}, {transform_indices = @transform_10, window_bounds = array<i64: 1, 1, 128>}, {transform_indices = @transform_11, window_bounds = array<i64: 1, 128, 128>}, {transform_indices = @transform_12, window_bounds = array<i64: 1, 128, 128>}, {transform_indices = @transform_13, window_bounds = array<i64: 1, 128, 128>}, {transform_indices = @transform_14, window_bounds = array<i64: 1, 1, 128>}, {transform_indices = @transform_15, window_bounds = array<i64: 1, 1, 128>}, {transform_indices = @transform_16, window_bounds = array<i64: 1, 1, 128>}, {transform_indices = @transform_17, window_bounds = array<i64: 1, 128, 128>}, {transform_indices = @transform_18, window_bounds = array<i64: 1, 1, 128>}, {transform_indices = @transform_19, window_bounds = array<i64: 1, 128, 128>}, {transform_indices = @transform_20, window_bounds = array<i64: 1, 1, 128>}, {pipeline_mode = #tpu.pipeline_mode<synchronous>, transform_indices = @transform_21, window_bounds = array<i64: 8, 128>}, {pipeline_mode = #tpu.pipeline_mode<synchronous>, transform_indices = @transform_22, window_bounds = array<i64: 16, 128>}]} {
    %c0_i32 = arith.constant 0 : i32
    %0 = arith.cmpi eq, %arg0, %c0_i32 : i32
    %1 = arith.extui %0 : i1 to i32
    %c0_i32_0 = arith.constant 0 : i32
    %2 = arith.cmpi ne, %1, %c0_i32_0 : i32
    scf.if %2 {
      %c0_81 = arith.constant 0 : index
      %c0_82 = arith.constant 0 : index
      %106 = vector.load %arg6[%c0_81, %c0_82] : memref<8x128xf32, #tpu.memory_space<vmem>>, vector<8x128xf32>
      %c0_83 = arith.constant 0 : index
      %c0_84 = arith.constant 0 : index
      %107 = vector.load %arg24[%c0_83, %c0_84] : memref<8x128xf32, #tpu.memory_space<vmem>>, vector<8x128xf32>
      tpu.vector_store %arg24[%c0_83, %c0_84], %106 {strides = array<i32>} : memref<8x128xf32, #tpu.memory_space<vmem>>, vector<8x128xf32>,
      %c0_85 = arith.constant 0 : index
      %c0_86 = arith.constant 0 : index
      %108 = vector.load %arg7[%c0_85, %c0_86] : memref<16x128xf32, #tpu.memory_space<vmem>>, vector<16x128xf32>
      %c0_87 = arith.constant 0 : index
      %c0_88 = arith.constant 0 : index
      %109 = vector.load %arg25[%c0_87, %c0_88] : memref<16x128xf32, #tpu.memory_space<vmem>>, vector<16x128xf32>
      tpu.vector_store %arg25[%c0_87, %c0_88], %108 {strides = array<i32>} : memref<16x128xf32, #tpu.memory_space<vmem>>, vector<16x128xf32>,
    } else {
    }
    %c0 = arith.constant 0 : index
    %c0_1 = arith.constant 0 : index
    %3 = vector.load %arg24[%c0, %c0_1] : memref<8x128xf32, #tpu.memory_space<vmem>>, vector<8x128xf32>
    %c0_2 = arith.constant 0 : index
    %c0_3 = arith.constant 0 : index
    %4 = vector.load %arg25[%c0_2, %c0_3] : memref<16x128xf32, #tpu.memory_space<vmem>>, vector<16x128xf32>
    %5 = tpu.iota {dimensions = array<i32: 1>} : vector<16x8xi32>
    %c0_4 = arith.constant 0 : index
    %c0_5 = arith.constant 0 : index
    %6 = vector.load %arg1[%c0_4, %c0_5] : memref<16x1xi32, #tpu.memory_space<vmem>>, vector<16x1xi32>
    %7 = vector.broadcast %6 : vector<16x1xi32> to vector<16x8xi32>
    %8 = arith.cmpi eq, %5, %7 : vector<16x8xi32>
    %9 = arith.extui %8 : vector<16x8xi1> to vector<16x8xi32>
    %10 = arith.sitofp %9 : vector<16x8xi32> to vector<16x8xf32>
    %c0_6 = arith.constant 0 : index
    %c0_7 = arith.constant 0 : index
    %11 = vector.load %arg2[%c0_6, %c0_7] : memref<16x1xi32, #tpu.memory_space<vmem>>, vector<16x1xi32>
    %12 = vector.broadcast %11 : vector<16x1xi32> to vector<16x8xi32>
    %13 = arith.cmpi eq, %5, %12 : vector<16x8xi32>
    %14 = arith.extui %13 : vector<16x8xi1> to vector<16x8xi32>
    %15 = arith.sitofp %14 : vector<16x8xi32> to vector<16x8xf32>
    %16 = tpu.iota {dimensions = array<i32: 0>} : vector<8x16xi32>
    %c0_8 = arith.constant 0 : index
    %c0_9 = arith.constant 0 : index
    %17 = vector.load %arg3[%c0_8, %c0_9] : memref<1x16xi32, #tpu.memory_space<vmem>>, vector<1x16xi32>
    %18 = vector.broadcast %17 : vector<1x16xi32> to vector<8x16xi32>
    %19 = arith.cmpi eq, %16, %18 : vector<8x16xi32>
    %20 = arith.extui %19 : vector<8x16xi1> to vector<8x16xi32>
    %21 = arith.sitofp %20 : vector<8x16xi32> to vector<8x16xf32>
    %c0_10 = arith.constant 0 : index
    %c0_11 = arith.constant 0 : index
    %22 = vector.load %arg4[%c0_10, %c0_11] : memref<1x16xi32, #tpu.memory_space<vmem>>, vector<1x16xi32>
    %23 = vector.broadcast %22 : vector<1x16xi32> to vector<8x16xi32>
    %24 = arith.cmpi eq, %16, %23 : vector<8x16xi32>
    %25 = arith.extui %24 : vector<8x16xi1> to vector<8x16xi32>
    %26 = arith.sitofp %25 : vector<8x16xi32> to vector<8x16xf32>
    %27 = arith.truncf %3 : vector<8x128xf32> to vector<8x128xbf16>
    %c0_12 = arith.constant 0 : index
    %c0_13 = arith.constant 0 : index
    %c0_14 = arith.constant 0 : index
    %28 = vector.load %arg8[%c0_12, %c0_13, %c0_14] : memref<1x128x128xbf16, #tpu.memory_space<vmem>>, vector<1x128x128xbf16>
    %29 = vector.shape_cast %28 : vector<1x128x128xbf16> to vector<128x128xbf16>
    %cst = arith.constant dense<0.000000e+00> : vector<8x128xf32>
    %30 = tpu.matmul %27, %29, %cst {dimension_numbers = #tpu.dot_dimension_numbers<[1], [0], [0], [1], [0, 0, 1, 1], [], []>} : vector<8x128xbf16>, vector<128x128xbf16>, vector<8x128xf32> -> vector<8x128xf32>
    %c0_15 = arith.constant 0 : index
    %c0_16 = arith.constant 0 : index
    %c0_17 = arith.constant 0 : index
    %31 = vector.load %arg10[%c0_15, %c0_16, %c0_17] : memref<1x128x128xbf16, #tpu.memory_space<vmem>>, vector<1x128x128xbf16>
    %32 = vector.shape_cast %31 : vector<1x128x128xbf16> to vector<128x128xbf16>
    %cst_18 = arith.constant dense<0.000000e+00> : vector<8x128xf32>
    %33 = tpu.matmul %27, %32, %cst_18 {dimension_numbers = #tpu.dot_dimension_numbers<[1], [0], [0], [1], [0, 0, 1, 1], [], []>} : vector<8x128xbf16>, vector<128x128xbf16>, vector<8x128xf32> -> vector<8x128xf32>
    %34 = arith.truncf %4 : vector<16x128xf32> to vector<16x128xbf16>
    %c0_19 = arith.constant 0 : index
    %c0_20 = arith.constant 0 : index
    %c0_21 = arith.constant 0 : index
    %35 = vector.load %arg9[%c0_19, %c0_20, %c0_21] : memref<1x128x128xbf16, #tpu.memory_space<vmem>>, vector<1x128x128xbf16>
    %36 = vector.shape_cast %35 : vector<1x128x128xbf16> to vector<128x128xbf16>
    %cst_22 = arith.constant dense<0.000000e+00> : vector<16x128xf32>
    %37 = tpu.matmul %34, %36, %cst_22 {dimension_numbers = #tpu.dot_dimension_numbers<[1], [0], [0], [1], [0, 0, 1, 1], [], []>} : vector<16x128xbf16>, vector<128x128xbf16>, vector<16x128xf32> -> vector<16x128xf32>
    %cst_23 = arith.constant dense<0.000000e+00> : vector<16x128xf32>
    %38 = tpu.matmul %10, %30, %cst_23 {dimension_numbers = #tpu.dot_dimension_numbers<[1], [0], [0], [1], [0, 0, 1, 1], [], []>} : vector<16x8xf32>, vector<8x128xf32>, vector<16x128xf32> -> vector<16x128xf32>
    %39 = arith.addf %38, %37 : vector<16x128xf32>
    %cst_24 = arith.constant dense<0.000000e+00> : vector<16x128xf32>
    %40 = tpu.matmul %15, %33, %cst_24 {dimension_numbers = #tpu.dot_dimension_numbers<[1], [0], [0], [1], [0, 0, 1, 1], [], []>} : vector<16x8xf32>, vector<8x128xf32>, vector<16x128xf32> -> vector<16x128xf32>
    %41 = arith.addf %39, %40 : vector<16x128xf32>
    %c0_25 = arith.constant 0 : index
    %c0_26 = arith.constant 0 : index
    %c0_27 = arith.constant 0 : index
    %42 = vector.load %arg11[%c0_25, %c0_26, %c0_27] : memref<1x1x128xf32, #tpu.memory_space<vmem>>, vector<1x1x128xf32>
    %43 = vector.shape_cast %42 : vector<1x1x128xf32> to vector<1x128xf32>
    %44 = vector.broadcast %43 : vector<1x128xf32> to vector<16x128xf32>
    %45 = arith.addf %41, %44 : vector<16x128xf32>
    %cst_28 = arith.constant 0.000000e+00 : f32
    %46 = vector.broadcast %cst_28 : f32 to vector<16x128xf32>
    %47 = arith.maximumf %45, %46 : vector<16x128xf32>
    %48 = arith.truncf %47 : vector<16x128xf32> to vector<16x128xbf16>
    %c0_29 = arith.constant 0 : index
    %c0_30 = arith.constant 0 : index
    %c0_31 = arith.constant 0 : index
    %49 = vector.load %arg12[%c0_29, %c0_30, %c0_31] : memref<1x128x128xbf16, #tpu.memory_space<vmem>>, vector<1x128x128xbf16>
    %50 = vector.shape_cast %49 : vector<1x128x128xbf16> to vector<128x128xbf16>
    %cst_32 = arith.constant dense<0.000000e+00> : vector<16x128xf32>
    %51 = tpu.matmul %48, %50, %cst_32 {dimension_numbers = #tpu.dot_dimension_numbers<[1], [0], [0], [1], [0, 0, 1, 1], [], []>} : vector<16x128xbf16>, vector<128x128xbf16>, vector<16x128xf32> -> vector<16x128xf32>
    %c0_33 = arith.constant 0 : index
    %c0_34 = arith.constant 0 : index
    %c0_35 = arith.constant 0 : index
    %52 = vector.load %arg15[%c0_33, %c0_34, %c0_35] : memref<1x1x128xf32, #tpu.memory_space<vmem>>, vector<1x1x128xf32>
    %53 = vector.shape_cast %52 : vector<1x1x128xf32> to vector<1x128xf32>
    %54 = vector.broadcast %53 : vector<1x128xf32> to vector<16x128xf32>
    %55 = arith.addf %51, %54 : vector<16x128xf32>
    %cst_36 = arith.constant 0.000000e+00 : f32
    %56 = vector.broadcast %cst_36 : f32 to vector<16x128xf32>
    %57 = arith.maximumf %55, %56 : vector<16x128xf32>
    %c0_37 = arith.constant 0 : index
    %c0_38 = arith.constant 0 : index
    %c0_39 = arith.constant 0 : index
    %58 = vector.load %arg13[%c0_37, %c0_38, %c0_39] : memref<1x128x128xbf16, #tpu.memory_space<vmem>>, vector<1x128x128xbf16>
    %59 = vector.shape_cast %58 : vector<1x128x128xbf16> to vector<128x128xbf16>
    %cst_40 = arith.constant dense<0.000000e+00> : vector<16x128xf32>
    %60 = tpu.matmul %48, %59, %cst_40 {dimension_numbers = #tpu.dot_dimension_numbers<[1], [0], [0], [1], [0, 0, 1, 1], [], []>} : vector<16x128xbf16>, vector<128x128xbf16>, vector<16x128xf32> -> vector<16x128xf32>
    %c0_41 = arith.constant 0 : index
    %c0_42 = arith.constant 0 : index
    %c0_43 = arith.constant 0 : index
    %61 = vector.load %arg16[%c0_41, %c0_42, %c0_43] : memref<1x1x128xf32, #tpu.memory_space<vmem>>, vector<1x1x128xf32>
    %62 = vector.shape_cast %61 : vector<1x1x128xf32> to vector<1x128xf32>
    %63 = vector.broadcast %62 : vector<1x128xf32> to vector<16x128xf32>
    %64 = arith.addf %60, %63 : vector<16x128xf32>
    %cst_44 = arith.constant 0.000000e+00 : f32
    %65 = vector.broadcast %cst_44 : f32 to vector<16x128xf32>
    %66 = arith.maximumf %64, %65 : vector<16x128xf32>
    %c0_45 = arith.constant 0 : index
    %c0_46 = arith.constant 0 : index
    %c0_47 = arith.constant 0 : index
    %67 = vector.load %arg14[%c0_45, %c0_46, %c0_47] : memref<1x128x128xbf16, #tpu.memory_space<vmem>>, vector<1x128x128xbf16>
    %68 = vector.shape_cast %67 : vector<1x128x128xbf16> to vector<128x128xbf16>
    %cst_48 = arith.constant dense<0.000000e+00> : vector<16x128xf32>
    %69 = tpu.matmul %48, %68, %cst_48 {dimension_numbers = #tpu.dot_dimension_numbers<[1], [0], [0], [1], [0, 0, 1, 1], [], []>} : vector<16x128xbf16>, vector<128x128xbf16>, vector<16x128xf32> -> vector<16x128xf32>
    %c0_49 = arith.constant 0 : index
    %c0_50 = arith.constant 0 : index
    %c0_51 = arith.constant 0 : index
    %70 = vector.load %arg17[%c0_49, %c0_50, %c0_51] : memref<1x1x128xf32, #tpu.memory_space<vmem>>, vector<1x1x128xf32>
    %71 = vector.shape_cast %70 : vector<1x1x128xf32> to vector<1x128xf32>
    %72 = vector.broadcast %71 : vector<1x128xf32> to vector<16x128xf32>
    %73 = arith.addf %69, %72 : vector<16x128xf32>
    %cst_52 = arith.constant 0.000000e+00 : f32
    %74 = vector.broadcast %cst_52 : f32 to vector<16x128xf32>
    %75 = arith.maximumf %73, %74 : vector<16x128xf32>
    %cst_53 = arith.constant dense<0.000000e+00> : vector<8x128xf32>
    %76 = tpu.matmul %21, %57, %cst_53 {dimension_numbers = #tpu.dot_dimension_numbers<[1], [0], [0], [1], [0, 0, 1, 1], [], []>} : vector<8x16xf32>, vector<16x128xf32>, vector<8x128xf32> -> vector<8x128xf32>
    %cst_54 = arith.constant dense<0.000000e+00> : vector<8x128xf32>
    %77 = tpu.matmul %26, %75, %cst_54 {dimension_numbers = #tpu.dot_dimension_numbers<[1], [0], [0], [1], [0, 0, 1, 1], [], []>} : vector<8x16xf32>, vector<16x128xf32>, vector<8x128xf32> -> vector<8x128xf32>
    %78 = arith.addf %76, %77 : vector<8x128xf32>
    %c0_55 = arith.constant 0 : index
    %c0_56 = arith.constant 0 : index
    %79 = vector.load %arg5[%c0_55, %c0_56] : memref<8x1xf32, #tpu.memory_space<vmem>>, vector<8x1xf32>
    %80 = vector.broadcast %79 : vector<8x1xf32> to vector<8x128xf32>
    %81 = arith.mulf %78, %80 : vector<8x128xf32>
    %82 = arith.truncf %81 : vector<8x128xf32> to vector<8x128xbf16>
    %c0_57 = arith.constant 0 : index
    %c0_58 = arith.constant 0 : index
    %c0_59 = arith.constant 0 : index
    %83 = vector.load %arg18[%c0_57, %c0_58, %c0_59] : memref<1x128x128xbf16, #tpu.memory_space<vmem>>, vector<1x128x128xbf16>
    %84 = vector.shape_cast %83 : vector<1x128x128xbf16> to vector<128x128xbf16>
    %cst_60 = arith.constant dense<0.000000e+00> : vector<8x128xf32>
    %85 = tpu.matmul %82, %84, %cst_60 {dimension_numbers = #tpu.dot_dimension_numbers<[1], [0], [0], [1], [0, 0, 1, 1], [], []>} : vector<8x128xbf16>, vector<128x128xbf16>, vector<8x128xf32> -> vector<8x128xf32>
    %c0_61 = arith.constant 0 : index
    %c0_62 = arith.constant 0 : index
    %c0_63 = arith.constant 0 : index
    %86 = vector.load %arg19[%c0_61, %c0_62, %c0_63] : memref<1x1x128xf32, #tpu.memory_space<vmem>>, vector<1x1x128xf32>
    %87 = vector.shape_cast %86 : vector<1x1x128xf32> to vector<1x128xf32>
    %88 = vector.broadcast %87 : vector<1x128xf32> to vector<8x128xf32>
    %89 = arith.addf %85, %88 : vector<8x128xf32>
    %cst_64 = arith.constant 0.000000e+00 : f32
    %90 = vector.broadcast %cst_64 : f32 to vector<8x128xf32>
    %91 = arith.maximumf %89, %90 : vector<8x128xf32>
    %92 = arith.truncf %91 : vector<8x128xf32> to vector<8x128xbf16>
    %c0_65 = arith.constant 0 : index
    %c0_66 = arith.constant 0 : index
    %c0_67 = arith.constant 0 : index
    %93 = vector.load %arg20[%c0_65, %c0_66, %c0_67] : memref<1x128x128xbf16, #tpu.memory_space<vmem>>, vector<1x128x128xbf16>
    %94 = vector.shape_cast %93 : vector<1x128x128xbf16> to vector<128x128xbf16>
    %cst_68 = arith.constant dense<0.000000e+00> : vector<8x128xf32>
    %95 = tpu.matmul %92, %94, %cst_68 {dimension_numbers = #tpu.dot_dimension_numbers<[1], [0], [0], [1], [0, 0, 1, 1], [], []>} : vector<8x128xbf16>, vector<128x128xbf16>, vector<8x128xf32> -> vector<8x128xf32>
    %c0_69 = arith.constant 0 : index
    %c0_70 = arith.constant 0 : index
    %c0_71 = arith.constant 0 : index
    %96 = vector.load %arg21[%c0_69, %c0_70, %c0_71] : memref<1x1x128xf32, #tpu.memory_space<vmem>>, vector<1x1x128xf32>
    %97 = vector.shape_cast %96 : vector<1x1x128xf32> to vector<1x128xf32>
    %98 = vector.broadcast %97 : vector<1x128xf32> to vector<8x128xf32>
    %99 = arith.addf %95, %98 : vector<8x128xf32>
    %cst_72 = arith.constant 0.000000e+00 : f32
    %100 = vector.broadcast %cst_72 : f32 to vector<8x128xf32>
    %101 = arith.maximumf %99, %100 : vector<8x128xf32>
    %c0_73 = arith.constant 0 : index
    %c0_74 = arith.constant 0 : index
    %102 = vector.load %arg24[%c0_73, %c0_74] : memref<8x128xf32, #tpu.memory_space<vmem>>, vector<8x128xf32>
    tpu.vector_store %arg24[%c0_73, %c0_74], %101 {strides = array<i32>} : memref<8x128xf32, #tpu.memory_space<vmem>>, vector<8x128xf32>,
    %c0_75 = arith.constant 0 : index
    %c0_76 = arith.constant 0 : index
    %103 = vector.load %arg25[%c0_75, %c0_76] : memref<16x128xf32, #tpu.memory_space<vmem>>, vector<16x128xf32>
    tpu.vector_store %arg25[%c0_75, %c0_76], %66 {strides = array<i32>} : memref<16x128xf32, #tpu.memory_space<vmem>>, vector<16x128xf32>,
    %c0_77 = arith.constant 0 : index
    %c0_78 = arith.constant 0 : index
    %104 = vector.load %arg22[%c0_77, %c0_78] : memref<8x128xf32, #tpu.memory_space<vmem>>, vector<8x128xf32>
    tpu.vector_store %arg22[%c0_77, %c0_78], %101 {strides = array<i32>} : memref<8x128xf32, #tpu.memory_space<vmem>>, vector<8x128xf32>,
    %c0_79 = arith.constant 0 : index
    %c0_80 = arith.constant 0 : index
    %105 = vector.load %arg23[%c0_79, %c0_80] : memref<16x128xf32, #tpu.memory_space<vmem>>, vector<16x128xf32>
    tpu.vector_store %arg23[%c0_79, %c0_80], %66 {strides = array<i32>} : memref<16x128xf32, #tpu.memory_space<vmem>>, vector<16x128xf32>,
    return
  }
  func.func @transform_0(%arg0: i32) -> (i32, i32) {
    %c0_i32 = arith.constant 0 : i32
    %c0_i32_0 = arith.constant 0 : i32
    %c0_i32_1 = arith.constant 0 : i32
    return %c0_i32, %c0_i32_0 : i32, i32
  }
  func.func @transform_1(%arg0: i32) -> (i32, i32) {
    %c0_i32 = arith.constant 0 : i32
    %c0_i32_0 = arith.constant 0 : i32
    %c0_i32_1 = arith.constant 0 : i32
    return %c0_i32, %c0_i32_0 : i32, i32
  }
  func.func @transform_2(%arg0: i32) -> (i32, i32) {
    %c0_i32 = arith.constant 0 : i32
    %c0_i32_0 = arith.constant 0 : i32
    %c0_i32_1 = arith.constant 0 : i32
    return %c0_i32, %c0_i32_0 : i32, i32
  }
  func.func @transform_3(%arg0: i32) -> (i32, i32) {
    %c0_i32 = arith.constant 0 : i32
    %c0_i32_0 = arith.constant 0 : i32
    %c0_i32_1 = arith.constant 0 : i32
    return %c0_i32, %c0_i32_0 : i32, i32
  }
  func.func @transform_4(%arg0: i32) -> (i32, i32) {
    %c0_i32 = arith.constant 0 : i32
    %c0_i32_0 = arith.constant 0 : i32
    %c0_i32_1 = arith.constant 0 : i32
    return %c0_i32, %c0_i32_0 : i32, i32
  }
  func.func @transform_5(%arg0: i32) -> (i32, i32) {
    %c0_i32 = arith.constant 0 : i32
    %c0_i32_0 = arith.constant 0 : i32
    %c0_i32_1 = arith.constant 0 : i32
    return %c0_i32, %c0_i32_0 : i32, i32
  }
  func.func @transform_6(%arg0: i32) -> (i32, i32) {
    %c0_i32 = arith.constant 0 : i32
    %c0_i32_0 = arith.constant 0 : i32
    %c0_i32_1 = arith.constant 0 : i32
    return %c0_i32, %c0_i32_0 : i32, i32
  }
  func.func @transform_7(%arg0: i32) -> (i32, i32, i32) {
    %c0_i32 = arith.constant 0 : i32
    %c0_i32_0 = arith.constant 0 : i32
    %c0_i32_1 = arith.constant 0 : i32
    return %arg0, %c0_i32, %c0_i32_0 : i32, i32, i32
  }
  func.func @transform_8(%arg0: i32) -> (i32, i32, i32) {
    %c0_i32 = arith.constant 0 : i32
    %c0_i32_0 = arith.constant 0 : i32
    %c0_i32_1 = arith.constant 0 : i32
    return %arg0, %c0_i32, %c0_i32_0 : i32, i32, i32
  }
  func.func @transform_9(%arg0: i32) -> (i32, i32, i32) {
    %c0_i32 = arith.constant 0 : i32
    %c0_i32_0 = arith.constant 0 : i32
    %c0_i32_1 = arith.constant 0 : i32
    return %arg0, %c0_i32, %c0_i32_0 : i32, i32, i32
  }
  func.func @transform_10(%arg0: i32) -> (i32, i32, i32) {
    %c0_i32 = arith.constant 0 : i32
    %c0_i32_0 = arith.constant 0 : i32
    %c0_i32_1 = arith.constant 0 : i32
    return %arg0, %c0_i32, %c0_i32_0 : i32, i32, i32
  }
  func.func @transform_11(%arg0: i32) -> (i32, i32, i32) {
    %c0_i32 = arith.constant 0 : i32
    %c0_i32_0 = arith.constant 0 : i32
    %c0_i32_1 = arith.constant 0 : i32
    return %arg0, %c0_i32, %c0_i32_0 : i32, i32, i32
  }
  func.func @transform_12(%arg0: i32) -> (i32, i32, i32) {
    %c0_i32 = arith.constant 0 : i32
    %c0_i32_0 = arith.constant 0 : i32
    %c0_i32_1 = arith.constant 0 : i32
    return %arg0, %c0_i32, %c0_i32_0 : i32, i32, i32
  }
  func.func @transform_13(%arg0: i32) -> (i32, i32, i32) {
    %c0_i32 = arith.constant 0 : i32
    %c0_i32_0 = arith.constant 0 : i32
    %c0_i32_1 = arith.constant 0 : i32
    return %arg0, %c0_i32, %c0_i32_0 : i32, i32, i32
  }
  func.func @transform_14(%arg0: i32) -> (i32, i32, i32) {
    %c0_i32 = arith.constant 0 : i32
    %c0_i32_0 = arith.constant 0 : i32
    %c0_i32_1 = arith.constant 0 : i32
    return %arg0, %c0_i32, %c0_i32_0 : i32, i32, i32
  }
  func.func @transform_15(%arg0: i32) -> (i32, i32, i32) {
    %c0_i32 = arith.constant 0 : i32
    %c0_i32_0 = arith.constant 0 : i32
    %c0_i32_1 = arith.constant 0 : i32
    return %arg0, %c0_i32, %c0_i32_0 : i32, i32, i32
  }
  func.func @transform_16(%arg0: i32) -> (i32, i32, i32) {
    %c0_i32 = arith.constant 0 : i32
    %c0_i32_0 = arith.constant 0 : i32
    %c0_i32_1 = arith.constant 0 : i32
    return %arg0, %c0_i32, %c0_i32_0 : i32, i32, i32
  }
  func.func @transform_17(%arg0: i32) -> (i32, i32, i32) {
    %c0_i32 = arith.constant 0 : i32
    %c0_i32_0 = arith.constant 0 : i32
    %c0_i32_1 = arith.constant 0 : i32
    return %arg0, %c0_i32, %c0_i32_0 : i32, i32, i32
  }
  func.func @transform_18(%arg0: i32) -> (i32, i32, i32) {
    %c0_i32 = arith.constant 0 : i32
    %c0_i32_0 = arith.constant 0 : i32
    %c0_i32_1 = arith.constant 0 : i32
    return %arg0, %c0_i32, %c0_i32_0 : i32, i32, i32
  }
  func.func @transform_19(%arg0: i32) -> (i32, i32, i32) {
    %c0_i32 = arith.constant 0 : i32
    %c0_i32_0 = arith.constant 0 : i32
    %c0_i32_1 = arith.constant 0 : i32
    return %arg0, %c0_i32, %c0_i32_0 : i32, i32, i32
  }
  func.func @transform_20(%arg0: i32) -> (i32, i32, i32) {
    %c0_i32 = arith.constant 0 : i32
    %c0_i32_0 = arith.constant 0 : i32
    %c0_i32_1 = arith.constant 0 : i32
    return %arg0, %c0_i32, %c0_i32_0 : i32, i32, i32
  }
  func.func @transform_21(%arg0: i32) -> (i32, i32) {
    %c0_i32 = arith.constant 0 : i32
    %c0_i32_0 = arith.constant 0 : i32
    %c0_i32_1 = arith.constant 0 : i32
    return %c0_i32, %c0_i32_0 : i32, i32
  }
  func.func @transform_22(%arg0: i32) -> (i32, i32) {
    %c0_i32 = arith.constant 0 : i32
    %c0_i32_0 = arith.constant 0 : i32
    %c0_i32_1 = arith.constant 0 : i32
    return %c0_i32, %c0_i32_0 : i32, i32
  }
}

</mosaic_0001>

<llo_original>
// kernel: tpu_custom_call.1
$region0: #{tpu_custom_call.1}
  #allocation0 [shape = 'u32[]', space=smem, size = 0x4, offset = 0x4, fixed_abs, tag = 'smem constant byte address 0x4 - core index']
  #allocation1 [shape = 'u32[144,128]{1,0:T(1,128)}', space=vmem, size = 0x12000, scoped, tag = 'internal scratch']
  #allocation2 [shape = 'f32[8,128]{1,0:T(8,128)}', space=vmem, size = 0x1000, scoped, tag = 'scratch operand']
  #allocation3 [shape = 'f32[16,128]{1,0:T(8,128)}', space=vmem, size = 0x2000, scoped, tag = 'scratch operand']
  %s0 = inlined_call_operand.vmem [shape: s32[16,1], index: 0, kind: input, shape index: {}]
  %s1 = inlined_call_operand.vmem [shape: s32[16,1], index: 1, kind: input, shape index: {}]
  %s2 = inlined_call_operand.vmem [shape: s32[1,16], index: 2, kind: input, shape index: {}]
  %s3 = inlined_call_operand.vmem [shape: s32[1,16], index: 3, kind: input, shape index: {}]
  %s4 = inlined_call_operand.vmem [shape: f32[8,1], index: 4, kind: input, shape index: {}]
  %s5 = inlined_call_operand.vmem [shape: f32[8,128], index: 5, kind: input, shape index: {}]
  %s6 = inlined_call_operand.vmem [shape: f32[16,128], index: 6, kind: input, shape index: {}]
  %s7 = inlined_call_operand.hbm [shape: bf16[2,128,128], index: 7, kind: input, shape index: {}]
  %s8 = inlined_call_operand.hbm [shape: bf16[2,128,128], index: 8, kind: input, shape index: {}]
  %s9 = inlined_call_operand.hbm [shape: bf16[2,128,128], index: 9, kind: input, shape index: {}]
  %s10 = inlined_call_operand.vmem [shape: f32[2,1,128], index: 10, kind: input, shape index: {}]
  %s11 = inlined_call_operand.hbm [shape: bf16[2,128,128], index: 11, kind: input, shape index: {}]
  %s12 = inlined_call_operand.hbm [shape: bf16[2,128,128], index: 12, kind: input, shape index: {}]
  %s13 = inlined_call_operand.hbm [shape: bf16[2,128,128], index: 13, kind: input, shape index: {}]
  %s14 = inlined_call_operand.vmem [shape: f32[2,1,128], index: 14, kind: input, shape index: {}]
  %s15 = inlined_call_operand.vmem [shape: f32[2,1,128], index: 15, kind: input, shape index: {}]
  %s16 = inlined_call_operand.vmem [shape: f32[2,1,128], index: 16, kind: input, shape index: {}]
  %s17 = inlined_call_operand.hbm [shape: bf16[2,128,128], index: 17, kind: input, shape index: {}]
  %s18 = inlined_call_operand.vmem [shape: f32[2,1,128], index: 18, kind: input, shape index: {}]
  %s19 = inlined_call_operand.hbm [shape: bf16[2,128,128], index: 19, kind: input, shape index: {}]
  %s20 = inlined_call_operand.vmem [shape: f32[2,1,128], index: 20, kind: input, shape index: {}]
  %s21 = inlined_call_operand.hbm [shape: f32[8,128], index: 21, kind: output, shape index: {0}]
  %s22 = inlined_call_operand.hbm [shape: f32[16,128], index: 22, kind: output, shape index: {1}]
  %23 = xla_tuple %s21, %s22
  %s24 = sld [smem:[#allocation0]]
  $region161: #{tpu_custom_call.1} parent=0
    _
  %s26 = ssub.s32 1, %s24
  %s27 = scalar_select 0, %s26, %s24
  $region1: #{tpu_custom_call.1} parent=0
    #allocation4 [shape = 'u8[65536]{0}', space=vmem, size = 0x10000, scoped, tag = 'input window, operand 7']
    #allocation5 [shape = 's32[2]{0}', space=sflag, size = 0x8, scoped, tag = 'scoped memory for tpu_custom_call.1']
    #allocation6 [shape = 's32[2]{0}', space=sflag, size = 0x8, scoped, tag = 'scoped memory for tpu_custom_call.1']
    #allocation7 [shape = 'u8[65536]{0}', space=vmem, size = 0x10000, scoped, tag = 'input window, operand 8']
    #allocation8 [shape = 's32[2]{0}', space=sflag, size = 0x8, scoped, tag = 'scoped memory for tpu_custom_call.1']
    #allocation9 [shape = 'u8[65536]{0}', space=vmem, size = 0x10000, scoped, tag = 'input window, operand 9']
    #allocation10 [shape = 'u8[65536]{0}', space=vmem, size = 0x10000, scoped, tag = 'input window, operand 11']
    #allocation11 [shape = 's32[2]{0}', space=sflag, size = 0x8, scoped, tag = 'scoped memory for tpu_custom_call.1']
    #allocation12 [shape = 'u8[65536]{0}', space=vmem, size = 0x10000, scoped, tag = 'input window, operand 12']
    #allocation13 [shape = 'u8[65536]{0}', space=vmem, size = 0x10000, scoped, tag = 'input window, operand 13']
    #allocation14 [shape = 's32[2]{0}', space=sflag, size = 0x8, scoped, tag = 'scoped memory for tpu_custom_call.1']
    #allocation15 [shape = 'u8[65536]{0}', space=vmem, size = 0x10000, scoped, tag = 'input window, operand 17']
    #allocation16 [shape = 'u8[65536]{0}', space=vmem, size = 0x10000, scoped, tag = 'input window, operand 19']
    #allocation17 [shape = 's32[2]{0}', space=sflag, size = 0x8, scoped, tag = 'scoped memory for tpu_custom_call.1']
    #allocation18 [shape = 'u8[4096]{0}', space=vmem, size = 0x1000, scoped, tag = 'output window, operand 0, single buffered']
    #allocation19 [shape = 'u8[8192]{0}', space=vmem, size = 0x2000, scoped, tag = 'output window, operand 1, single buffered']
    #allocation20 [shape = 's32[1]{0}', space=sflag, size = 0x4, scoped, tag = 'scoped memory for tpu_custom_call.1']
    %28 = vsyncpa [#allocation5], 0
    %s29 = scalar_lea.sflag [#allocation5], 1
    %30 = vsyncpa %s29, 0
    %31 = vsyncpa [#allocation8], 0
    %s32 = scalar_lea.sflag [#allocation8], 1
    %33 = vsyncpa %s32, 0
    %34 = vsyncpa [#allocation11], 0
    %s35 = scalar_lea.sflag [#allocation11], 1
    %36 = vsyncpa %s35, 0
    %37 = vsyncpa [#allocation14], 0
    %s38 = scalar_lea.sflag [#allocation14], 1
    %39 = vsyncpa %s38, 0
    %40 = vsyncpa [#allocation17], 0
    %s41 = scalar_lea.sflag [#allocation17], 1
    %42 = vsyncpa %s41, 0
    %43 = vsyncpa [#allocation6], 0
    %44 = vsyncpa [#allocation20], 0
    loop: start=0, step=1, limit=4
    $region2: #{tpu_custom_call.1} parent=1 // loop_pre_header
      _
    $region3: #{tpu_custom_call.1} parent=1 // loop_header
      %s46 = sphi 0, %s50
      %p47 = scmp.ge.s32.totalorder %s46, 4
      %s54 = sphi 0, %s54
      %s56 = sphi 0, %s54
      %s57 = sphi 0, %s56
      %s71 = sphi 0, %s57
      %s75 = sphi 0, %s75
      %s77 = sphi 0, %s75
      %s78 = sphi 0, %s77
      %s92 = sphi 0, %s78
      %s96 = sphi 0, %s96
      %s98 = sphi 0, %s96
      %s99 = sphi 0, %s98
      %s113 = sphi 0, %s99
      %s117 = sphi 0, %s117
      %s119 = sphi 0, %s117
      %s120 = sphi 0, %s119
      %s134 = sphi 0, %s120
      %s138 = sphi 0, %s138
      %s140 = sphi 0, %s138
      %s141 = sphi 0, %s140
      %s155 = sphi 0, %s141
      %s159 = sphi 0, %s159
      %s161 = sphi 0, %s159
      %s162 = sphi 0, %s161
      %s176 = sphi 0, %s162
      %s180 = sphi 0, %s180
      %s182 = sphi 0, %s180
      %s183 = sphi 0, %s182
      %s197 = sphi 0, %s183
      %s203 = sphi 0, %s205
      %s206 = sphi 0, %s203
      %s207 = sphi 0, %s206
      %s223 = sphi 0, %s207
      %s229 = sphi 0, %s231
      %s232 = sphi 0, %s229
      %s233 = sphi 0, %s232
      %s249 = sphi 0, %s233
      %s255 = sphi 0, %s257
      %s258 = sphi 0, %s255
      %s259 = sphi 0, %s258
      %s275 = sphi 0, %s259
      %s281 = sphi 0, %s283
      %s284 = sphi 0, %s281
      %s285 = sphi 0, %s284
      %s301 = sphi 0, %s285
      %s307 = sphi 0, %s309
      %s310 = sphi 0, %s307
      %s311 = sphi 0, %s310
      %s327 = sphi 0, %s311
      %s333 = sphi 0, %s335
      %s336 = sphi 0, %s333
      %s337 = sphi 0, %s336
      %s353 = sphi 0, %s337
      %s359 = sphi 0, %s361
      %s362 = sphi 0, %s359
      %s363 = sphi 0, %s362
      %s379 = sphi 0, %s363
      %s385 = sphi 0, %s387
      %s388 = sphi 0, %s385
      %s389 = sphi 0, %s388
      %s405 = sphi 0, %s389
      %s411 = sphi 0, %s413
      %s414 = sphi 0, %s411
      %s415 = sphi 0, %s414
      %s431 = sphi 0, %s415
      %s437 = sphi 0, %s439
      %s440 = sphi 0, %s437
      %s441 = sphi 0, %s440
      %s457 = sphi 0, %s441
      %s463 = sphi 0, %s465
      %s466 = sphi 0, %s463
      %s467 = sphi 0, %s466
      %s483 = sphi 0, %s467
      %s489 = sphi 0, %s491
      %s492 = sphi 0, %s489
      %s493 = sphi 0, %s492
      %s509 = sphi 0, %s493
      %s515 = sphi 0, %s517
      %s518 = sphi 0, %s515
      %s519 = sphi 0, %s518
      %s535 = sphi 0, %s519
      %s541 = sphi 0, %s543
      %s544 = sphi 0, %s541
      %s545 = sphi 0, %s544
      %s561 = sphi 0, %s545
      %s565 = sphi 0, %s565
      %s567 = sphi 0, %s565
      %s568 = sphi 0, %s567
      %s582 = sphi 0, %s568
      %s586 = sphi 0, %s586
      %s588 = sphi 0, %s586
      %s589 = sphi 0, %s588
      %s603 = sphi 0, %s589
    $region4: #{tpu_custom_call.1} parent=1 // loop_header_branch
      %49 = sbr.rel (%p47) target = $region8
    $region5: #{tpu_custom_call.1} parent=1 // loop_body
      %s51 = ssub.s32 %s46, 1
      %s52 = ssub.s32 %s46, 2
      %s53 = sadd.s32 %s46, 1
      %s55 = sadd.s32 %s54, 1
      %p58 = scmp.eq.s32.totalorder %s46, 1
      %p59 = scmp.ne.s32.totalorder %s54, %s56
      %p60 = scmp.eq.s32.totalorder %s46, 0
      %p61 = por %p59, %p60
      %p62 = scmp.ne.s32.totalorder %s54, %s56
      %p63 = scmp.eq.s32.totalorder %s51, 1
      %p64 = por %p62, %p63
      %p65 = scmp.ne.s32.totalorder %s56, %s57
      %p66 = scmp.eq.s32.totalorder %s51, 0
      %p67 = por %p65, %p66
      %p68 = scmp.ne.s32.totalorder %s56, %s57
      %p69 = scmp.eq.s32.totalorder %s52, 1
      %p70 = por %p68, %p69
      %p72 = scmp.ne.s32.totalorder %s57, %s71
      %p73 = scmp.eq.s32.totalorder %s52, 0
      %p74 = por %p72, %p73
      %s76 = sadd.s32 %s75, 1
      %p79 = scmp.eq.s32.totalorder %s46, 1
      %p80 = scmp.ne.s32.totalorder %s75, %s77
      %p81 = scmp.eq.s32.totalorder %s46, 0
      %p82 = por %p80, %p81
      %p83 = scmp.ne.s32.totalorder %s75, %s77
      %p84 = scmp.eq.s32.totalorder %s51, 1
      %p85 = por %p83, %p84
      %p86 = scmp.ne.s32.totalorder %s77, %s78
      %p87 = scmp.eq.s32.totalorder %s51, 0
      %p88 = por %p86, %p87
      %p89 = scmp.ne.s32.totalorder %s77, %s78
      %p90 = scmp.eq.s32.totalorder %s52, 1
      %p91 = por %p89, %p90
      %p93 = scmp.ne.s32.totalorder %s78, %s92
      %p94 = scmp.eq.s32.totalorder %s52, 0
      %p95 = por %p93, %p94
      %s97 = sadd.s32 %s96, 1
      %p100 = scmp.eq.s32.totalorder %s46, 1
      %p101 = scmp.ne.s32.totalorder %s96, %s98
      %p102 = scmp.eq.s32.totalorder %s46, 0
      %p103 = por %p101, %p102
      %p104 = scmp.ne.s32.totalorder %s96, %s98
      %p105 = scmp.eq.s32.totalorder %s51, 1
      %p106 = por %p104, %p105
      %p107 = scmp.ne.s32.totalorder %s98, %s99
      %p108 = scmp.eq.s32.totalorder %s51, 0
      %p109 = por %p107, %p108
      %p110 = scmp.ne.s32.totalorder %s98, %s99
      %p111 = scmp.eq.s32.totalorder %s52, 1
      %p112 = por %p110, %p111
      %p114 = scmp.ne.s32.totalorder %s99, %s113
      %p115 = scmp.eq.s32.totalorder %s52, 0
      %p116 = por %p114, %p115
      %s118 = sadd.s32 %s117, 1
      %p121 = scmp.eq.s32.totalorder %s46, 1
      %p122 = scmp.ne.s32.totalorder %s117, %s119
      %p123 = scmp.eq.s32.totalorder %s46, 0
      %p124 = por %p122, %p123
      %p125 = scmp.ne.s32.totalorder %s117, %s119
      %p126 = scmp.eq.s32.totalorder %s51, 1
      %p127 = por %p125, %p126
      %p128 = scmp.ne.s32.totalorder %s119, %s120
      %p129 = scmp.eq.s32.totalorder %s51, 0
      %p130 = por %p128, %p129
      %p131 = scmp.ne.s32.totalorder %s119, %s120
      %p132 = scmp.eq.s32.totalorder %s52, 1
      %p133 = por %p131, %p132
      %p135 = scmp.ne.s32.totalorder %s120, %s134
      %p136 = scmp.eq.s32.totalorder %s52, 0
      %p137 = por %p135, %p136
      %s139 = sadd.s32 %s138, 1
      %p142 = scmp.eq.s32.totalorder %s46, 1
      %p143 = scmp.ne.s32.totalorder %s138, %s140
      %p144 = scmp.eq.s32.totalorder %s46, 0
      %p145 = por %p143, %p144
      %p146 = scmp.ne.s32.totalorder %s138, %s140
      %p147 = scmp.eq.s32.totalorder %s51, 1
      %p148 = por %p146, %p147
      %p149 = scmp.ne.s32.totalorder %s140, %s141
      %p150 = scmp.eq.s32.totalorder %s51, 0
      %p151 = por %p149, %p150
      %p152 = scmp.ne.s32.totalorder %s140, %s141
      %p153 = scmp.eq.s32.totalorder %s52, 1
      %p154 = por %p152, %p153
      %p156 = scmp.ne.s32.totalorder %s141, %s155
      %p157 = scmp.eq.s32.totalorder %s52, 0
      %p158 = por %p156, %p157
      %s160 = sadd.s32 %s159, 1
      %p163 = scmp.eq.s32.totalorder %s46, 1
      %p164 = scmp.ne.s32.totalorder %s159, %s161
      %p165 = scmp.eq.s32.totalorder %s46, 0
      %p166 = por %p164, %p165
      %p167 = scmp.ne.s32.totalorder %s159, %s161
      %p168 = scmp.eq.s32.totalorder %s51, 1
      %p169 = por %p167, %p168
      %p170 = scmp.ne.s32.totalorder %s161, %s162
      %p171 = scmp.eq.s32.totalorder %s51, 0
      %p172 = por %p170, %p171
      %p173 = scmp.ne.s32.totalorder %s161, %s162
      %p174 = scmp.eq.s32.totalorder %s52, 1
      %p175 = por %p173, %p174
      %p177 = scmp.ne.s32.totalorder %s162, %s176
      %p178 = scmp.eq.s32.totalorder %s52, 0
      %p179 = por %p177, %p178
      %s181 = sadd.s32 %s180, 1
      %p184 = scmp.eq.s32.totalorder %s46, 1
      %p185 = scmp.ne.s32.totalorder %s180, %s182
      %p186 = scmp.eq.s32.totalorder %s46, 0
      %p187 = por %p185, %p186
      %p188 = scmp.ne.s32.totalorder %s180, %s182
      %p189 = scmp.eq.s32.totalorder %s51, 1
      %p190 = por %p188, %p189
      %p191 = scmp.ne.s32.totalorder %s182, %s183
      %p192 = scmp.eq.s32.totalorder %s51, 0
      %p193 = por %p191, %p192
      %p194 = scmp.ne.s32.totalorder %s182, %s183
      %p195 = scmp.eq.s32.totalorder %s52, 1
      %p196 = por %p194, %p195
      %p198 = scmp.ne.s32.totalorder %s183, %s197
      %p199 = scmp.eq.s32.totalorder %s52, 0
      %p200 = por %p198, %p199
      %s201 = ssub.s32 %s46, %s53
      %p202 = scmp.eq.s32.totalorder %s201, 0
      %s204 = sadd.s32 %s203, 1
      %s205 = scalar_select %p202, %s203, %s204
      %p208 = pneg %p202
      %p209 = scmp.eq.s32.totalorder %s46, 1
      %p210 = por %p208, %p209
      %p211 = scmp.ne.s32.totalorder %s203, %s206
      %p212 = scmp.eq.s32.totalorder %s46, 0
      %p213 = por %p211, %p212
      %p214 = scmp.ne.s32.totalorder %s203, %s206
      %p215 = scmp.eq.s32.totalorder %s51, 1
      %p216 = por %p214, %p215
      %p217 = scmp.ne.s32.totalorder %s206, %s207
      %p218 = scmp.eq.s32.totalorder %s51, 0
      %p219 = por %p217, %p218
      %p220 = scmp.ne.s32.totalorder %s206, %s207
      %p221 = scmp.eq.s32.totalorder %s52, 1
      %p222 = por %p220, %p221
      %p224 = scmp.ne.s32.totalorder %s207, %s223
      %p225 = scmp.eq.s32.totalorder %s52, 0
      %p226 = por %p224, %p225
      %s227 = ssub.s32 %s46, %s53
      %p228 = scmp.eq.s32.totalorder %s227, 0
      %s230 = sadd.s32 %s229, 1
      %s231 = scalar_select %p228, %s229, %s230
      %p234 = pneg %p228
      %p235 = scmp.eq.s32.totalorder %s46, 1
      %p236 = por %p234, %p235
      %p237 = scmp.ne.s32.totalorder %s229, %s232
      %p238 = scmp.eq.s32.totalorder %s46, 0
      %p239 = por %p237, %p238
      %p240 = scmp.ne.s32.totalorder %s229, %s232
      %p241 = scmp.eq.s32.totalorder %s51, 1
      %p242 = por %p240, %p241
      %p243 = scmp.ne.s32.totalorder %s232, %s233
      %p244 = scmp.eq.s32.totalorder %s51, 0
      %p245 = por %p243, %p244
      %p246 = scmp.ne.s32.totalorder %s232, %s233
      %p247 = scmp.eq.s32.totalorder %s52, 1
      %p248 = por %p246, %p247
      %p250 = scmp.ne.s32.totalorder %s233, %s249
      %p251 = scmp.eq.s32.totalorder %s52, 0
      %p252 = por %p250, %p251
      %s253 = ssub.s32 %s46, %s53
      %p254 = scmp.eq.s32.totalorder %s253, 0
      %s256 = sadd.s32 %s255, 1
      %s257 = scalar_select %p254, %s255, %s256
      %p260 = pneg %p254
      %p261 = scmp.eq.s32.totalorder %s46, 1
      %p262 = por %p260, %p261
      %p263 = scmp.ne.s32.totalorder %s255, %s258
      %p264 = scmp.eq.s32.totalorder %s46, 0
      %p265 = por %p263, %p264
      %p266 = scmp.ne.s32.totalorder %s255, %s258
      %p267 = scmp.eq.s32.totalorder %s51, 1
      %p268 = por %p266, %p267
      %p269 = scmp.ne.s32.totalorder %s258, %s259
      %p270 = scmp.eq.s32.totalorder %s51, 0
      %p271 = por %p269, %p270
      %p272 = scmp.ne.s32.totalorder %s258, %s259
      %p273 = scmp.eq.s32.totalorder %s52, 1
      %p274 = por %p272, %p273
      %p276 = scmp.ne.s32.totalorder %s259, %s275
      %p277 = scmp.eq.s32.totalorder %s52, 0
      %p278 = por %p276, %p277
      %s279 = ssub.s32 %s46, %s53
      %p280 = scmp.eq.s32.totalorder %s279, 0
      %s282 = sadd.s32 %s281, 1
      %s283 = scalar_select %p280, %s281, %s282
      %p286 = pneg %p280
      %p287 = scmp.eq.s32.totalorder %s46, 1
      %p288 = por %p286, %p287
      %p289 = scmp.ne.s32.totalorder %s281, %s284
      %p290 = scmp.eq.s32.totalorder %s46, 0
      %p291 = por %p289, %p290
      %p292 = scmp.ne.s32.totalorder %s281, %s284
      %p293 = scmp.eq.s32.totalorder %s51, 1
      %p294 = por %p292, %p293
      %p295 = scmp.ne.s32.totalorder %s284, %s285
      %p296 = scmp.eq.s32.totalorder %s51, 0
      %p297 = por %p295, %p296
      %p298 = scmp.ne.s32.totalorder %s284, %s285
      %p299 = scmp.eq.s32.totalorder %s52, 1
      %p300 = por %p298, %p299
      %p302 = scmp.ne.s32.totalorder %s285, %s301
      %p303 = scmp.eq.s32.totalorder %s52, 0
      %p304 = por %p302, %p303
      %s305 = ssub.s32 %s46, %s53
      %p306 = scmp.eq.s32.totalorder %s305, 0
      %s308 = sadd.s32 %s307, 1
      %s309 = scalar_select %p306, %s307, %s308
      %p312 = pneg %p306
      %p313 = scmp.eq.s32.totalorder %s46, 1
      %p314 = por %p312, %p313
      %p315 = scmp.ne.s32.totalorder %s307, %s310
      %p316 = scmp.eq.s32.totalorder %s46, 0
      %p317 = por %p315, %p316
      %p318 = scmp.ne.s32.totalorder %s307, %s310
      %p319 = scmp.eq.s32.totalorder %s51, 1
      %p320 = por %p318, %p319
      %p321 = scmp.ne.s32.totalorder %s310, %s311
      %p322 = scmp.eq.s32.totalorder %s51, 0
      %p323 = por %p321, %p322
      %p324 = scmp.ne.s32.totalorder %s310, %s311
      %p325 = scmp.eq.s32.totalorder %s52, 1
      %p326 = por %p324, %p325
      %p328 = scmp.ne.s32.totalorder %s311, %s327
      %p329 = scmp.eq.s32.totalorder %s52, 0
      %p330 = por %p328, %p329
      %s331 = ssub.s32 %s46, %s53
      %p332 = scmp.eq.s32.totalorder %s331, 0
      %s334 = sadd.s32 %s333, 1
      %s335 = scalar_select %p332, %s333, %s334
      %p338 = pneg %p332
      %p339 = scmp.eq.s32.totalorder %s46, 1
      %p340 = por %p338, %p339
      %p341 = scmp.ne.s32.totalorder %s333, %s336
      %p342 = scmp.eq.s32.totalorder %s46, 0
      %p343 = por %p341, %p342
      %p344 = scmp.ne.s32.totalorder %s333, %s336
      %p345 = scmp.eq.s32.totalorder %s51, 1
      %p346 = por %p344, %p345
      %p347 = scmp.ne.s32.totalorder %s336, %s337
      %p348 = scmp.eq.s32.totalorder %s51, 0
      %p349 = por %p347, %p348
      %p350 = scmp.ne.s32.totalorder %s336, %s337
      %p351 = scmp.eq.s32.totalorder %s52, 1
      %p352 = por %p350, %p351
      %p354 = scmp.ne.s32.totalorder %s337, %s353
      %p355 = scmp.eq.s32.totalorder %s52, 0
      %p356 = por %p354, %p355
      %s357 = ssub.s32 %s46, %s53
      %p358 = scmp.eq.s32.totalorder %s357, 0
      %s360 = sadd.s32 %s359, 1
      %s361 = scalar_select %p358, %s359, %s360
      %p364 = pneg %p358
      %p365 = scmp.eq.s32.totalorder %s46, 1
      %p366 = por %p364, %p365
      %p367 = scmp.ne.s32.totalorder %s359, %s362
      %p368 = scmp.eq.s32.totalorder %s46, 0
      %p369 = por %p367, %p368
      %p370 = scmp.ne.s32.totalorder %s359, %s362
      %p371 = scmp.eq.s32.totalorder %s51, 1
      %p372 = por %p370, %p371
      %p373 = scmp.ne.s32.totalorder %s362, %s363
      %p374 = scmp.eq.s32.totalorder %s51, 0
      %p375 = por %p373, %p374
      %p376 = scmp.ne.s32.totalorder %s362, %s363
      %p377 = scmp.eq.s32.totalorder %s52, 1
      %p378 = por %p376, %p377
      %p380 = scmp.ne.s32.totalorder %s363, %s379
      %p381 = scmp.eq.s32.totalorder %s52, 0
      %p382 = por %p380, %p381
      %s383 = ssub.s32 %s46, %s53
      %p384 = scmp.eq.s32.totalorder %s383, 0
      %s386 = sadd.s32 %s385, 1
      %s387 = scalar_select %p384, %s385, %s386
      %p390 = pneg %p384
      %p391 = scmp.eq.s32.totalorder %s46, 1
      %p392 = por %p390, %p391
      %p393 = scmp.ne.s32.totalorder %s385, %s388
      %p394 = scmp.eq.s32.totalorder %s46, 0
      %p395 = por %p393, %p394
      %p396 = scmp.ne.s32.totalorder %s385, %s388
      %p397 = scmp.eq.s32.totalorder %s51, 1
      %p398 = por %p396, %p397
      %p399 = scmp.ne.s32.totalorder %s388, %s389
      %p400 = scmp.eq.s32.totalorder %s51, 0
      %p401 = por %p399, %p400
      %p402 = scmp.ne.s32.totalorder %s388, %s389
      %p403 = scmp.eq.s32.totalorder %s52, 1
      %p404 = por %p402, %p403
      %p406 = scmp.ne.s32.totalorder %s389, %s405
      %p407 = scmp.eq.s32.totalorder %s52, 0
      %p408 = por %p406, %p407
      %s409 = ssub.s32 %s46, %s53
      %p410 = scmp.eq.s32.totalorder %s409, 0
      %s412 = sadd.s32 %s411, 1
      %s413 = scalar_select %p410, %s411, %s412
      %p416 = pneg %p410
      %p417 = scmp.eq.s32.totalorder %s46, 1
      %p418 = por %p416, %p417
      %p419 = scmp.ne.s32.totalorder %s411, %s414
      %p420 = scmp.eq.s32.totalorder %s46, 0
      %p421 = por %p419, %p420
      %p422 = scmp.ne.s32.totalorder %s411, %s414
      %p423 = scmp.eq.s32.totalorder %s51, 1
      %p424 = por %p422, %p423
      %p425 = scmp.ne.s32.totalorder %s414, %s415
      %p426 = scmp.eq.s32.totalorder %s51, 0
      %p427 = por %p425, %p426
      %p428 = scmp.ne.s32.totalorder %s414, %s415
      %p429 = scmp.eq.s32.totalorder %s52, 1
      %p430 = por %p428, %p429
      %p432 = scmp.ne.s32.totalorder %s415, %s431
      %p433 = scmp.eq.s32.totalorder %s52, 0
      %p434 = por %p432, %p433
      %s435 = ssub.s32 %s46, %s53
      %p436 = scmp.eq.s32.totalorder %s435, 0
      %s438 = sadd.s32 %s437, 1
      %s439 = scalar_select %p436, %s437, %s438
      %p442 = pneg %p436
      %p443 = scmp.eq.s32.totalorder %s46, 1
      %p444 = por %p442, %p443
      %p445 = scmp.ne.s32.totalorder %s437, %s440
      %p446 = scmp.eq.s32.totalorder %s46, 0
      %p447 = por %p445, %p446
      %p448 = scmp.ne.s32.totalorder %s437, %s440
      %p449 = scmp.eq.s32.totalorder %s51, 1
      %p450 = por %p448, %p449
      %p451 = scmp.ne.s32.totalorder %s440, %s441
      %p452 = scmp.eq.s32.totalorder %s51, 0
      %p453 = por %p451, %p452
      %p454 = scmp.ne.s32.totalorder %s440, %s441
      %p455 = scmp.eq.s32.totalorder %s52, 1
      %p456 = por %p454, %p455
      %p458 = scmp.ne.s32.totalorder %s441, %s457
      %p459 = scmp.eq.s32.totalorder %s52, 0
      %p460 = por %p458, %p459
      %s461 = ssub.s32 %s46, %s53
      %p462 = scmp.eq.s32.totalorder %s461, 0
      %s464 = sadd.s32 %s463, 1
      %s465 = scalar_select %p462, %s463, %s464
      %p468 = pneg %p462
      %p469 = scmp.eq.s32.totalorder %s46, 1
      %p470 = por %p468, %p469
      %p471 = scmp.ne.s32.totalorder %s463, %s466
      %p472 = scmp.eq.s32.totalorder %s46, 0
      %p473 = por %p471, %p472
      %p474 = scmp.ne.s32.totalorder %s463, %s466
      %p475 = scmp.eq.s32.totalorder %s51, 1
      %p476 = por %p474, %p475
      %p477 = scmp.ne.s32.totalorder %s466, %s467
      %p478 = scmp.eq.s32.totalorder %s51, 0
      %p479 = por %p477, %p478
      %p480 = scmp.ne.s32.totalorder %s466, %s467
      %p481 = scmp.eq.s32.totalorder %s52, 1
      %p482 = por %p480, %p481
      %p484 = scmp.ne.s32.totalorder %s467, %s483
      %p485 = scmp.eq.s32.totalorder %s52, 0
      %p486 = por %p484, %p485
      %s487 = ssub.s32 %s46, %s53
      %p488 = scmp.eq.s32.totalorder %s487, 0
      %s490 = sadd.s32 %s489, 1
      %s491 = scalar_select %p488, %s489, %s490
      %p494 = pneg %p488
      %p495 = scmp.eq.s32.totalorder %s46, 1
      %p496 = por %p494, %p495
      %p497 = scmp.ne.s32.totalorder %s489, %s492
      %p498 = scmp.eq.s32.totalorder %s46, 0
      %p499 = por %p497, %p498
      %p500 = scmp.ne.s32.totalorder %s489, %s492
      %p501 = scmp.eq.s32.totalorder %s51, 1
      %p502 = por %p500, %p501
      %p503 = scmp.ne.s32.totalorder %s492, %s493
      %p504 = scmp.eq.s32.totalorder %s51, 0
      %p505 = por %p503, %p504
      %p506 = scmp.ne.s32.totalorder %s492, %s493
      %p507 = scmp.eq.s32.totalorder %s52, 1
      %p508 = por %p506, %p507
      %p510 = scmp.ne.s32.totalorder %s493, %s509
      %p511 = scmp.eq.s32.totalorder %s52, 0
      %p512 = por %p510, %p511
      %s513 = ssub.s32 %s46, %s53
      %p514 = scmp.eq.s32.totalorder %s513, 0
      %s516 = sadd.s32 %s515, 1
      %s517 = scalar_select %p514, %s515, %s516
      %p520 = pneg %p514
      %p521 = scmp.eq.s32.totalorder %s46, 1
      %p522 = por %p520, %p521
      %p523 = scmp.ne.s32.totalorder %s515, %s518
      %p524 = scmp.eq.s32.totalorder %s46, 0
      %p525 = por %p523, %p524
      %p526 = scmp.ne.s32.totalorder %s515, %s518
      %p527 = scmp.eq.s32.totalorder %s51, 1
      %p528 = por %p526, %p527
      %p529 = scmp.ne.s32.totalorder %s518, %s519
      %p530 = scmp.eq.s32.totalorder %s51, 0
      %p531 = por %p529, %p530
      %p532 = scmp.ne.s32.totalorder %s518, %s519
      %p533 = scmp.eq.s32.totalorder %s52, 1
      %p534 = por %p532, %p533
      %p536 = scmp.ne.s32.totalorder %s519, %s535
      %p537 = scmp.eq.s32.totalorder %s52, 0
      %p538 = por %p536, %p537
      %s539 = ssub.s32 %s46, %s53
      %p540 = scmp.eq.s32.totalorder %s539, 0
      %s542 = sadd.s32 %s541, 1
      %s543 = scalar_select %p540, %s541, %s542
      %p546 = pneg %p540
      %p547 = scmp.eq.s32.totalorder %s46, 1
      %p548 = por %p546, %p547
      %p549 = scmp.ne.s32.totalorder %s541, %s544
      %p550 = scmp.eq.s32.totalorder %s46, 0
      %p551 = por %p549, %p550
      %p552 = scmp.ne.s32.totalorder %s541, %s544
      %p553 = scmp.eq.s32.totalorder %s51, 1
      %p554 = por %p552, %p553
      %p555 = scmp.ne.s32.totalorder %s544, %s545
      %p556 = scmp.eq.s32.totalorder %s51, 0
      %p557 = por %p555, %p556
      %p558 = scmp.ne.s32.totalorder %s544, %s545
      %p559 = scmp.eq.s32.totalorder %s52, 1
      %p560 = por %p558, %p559
      %p562 = scmp.ne.s32.totalorder %s545, %s561
      %p563 = scmp.eq.s32.totalorder %s52, 0
      %p564 = por %p562, %p563
      %s566 = sadd.s32 %s565, 1
      %p569 = scmp.eq.s32.totalorder %s46, 1
      %p570 = scmp.ne.s32.totalorder %s565, %s567
      %p571 = scmp.eq.s32.totalorder %s46, 0
      %p572 = por %p570, %p571
      %p573 = scmp.ne.s32.totalorder %s565, %s567
      %p574 = scmp.eq.s32.totalorder %s51, 1
      %p575 = por %p573, %p574
      %p576 = scmp.ne.s32.totalorder %s567, %s568
      %p577 = scmp.eq.s32.totalorder %s51, 0
      %p578 = por %p576, %p577
      %p579 = scmp.ne.s32.totalorder %s567, %s568
      %p580 = scmp.eq.s32.totalorder %s52, 1
      %p581 = por %p579, %p580
      %p583 = scmp.ne.s32.totalorder %s568, %s582
      %p584 = scmp.eq.s32.totalorder %s52, 0
      %p585 = por %p583, %p584
      %s587 = sadd.s32 %s586, 1
      %p590 = scmp.eq.s32.totalorder %s46, 1
      %p591 = scmp.ne.s32.totalorder %s586, %s588
      %p592 = scmp.eq.s32.totalorder %s46, 0
      %p593 = por %p591, %p592
      %p594 = scmp.ne.s32.totalorder %s586, %s588
      %p595 = scmp.eq.s32.totalorder %s51, 1
      %p596 = por %p594, %p595
      %p597 = scmp.ne.s32.totalorder %s588, %s589
      %p598 = scmp.eq.s32.totalorder %s51, 0
      %p599 = por %p597, %p598
      %p600 = scmp.ne.s32.totalorder %s588, %s589
      %p601 = scmp.eq.s32.totalorder %s52, 1
      %p602 = por %p600, %p601
      %p604 = scmp.ne.s32.totalorder %s589, %s603
      %p605 = scmp.eq.s32.totalorder %s52, 0
      %p606 = por %p604, %p605
      %p607 = scmp.le.s32.totalorder 1, %s46
      %p608 = scmp.lt.s32.totalorder %s46, 3
      %p609 = pnand %p607, %p608
      %p610 = pneg %p609
      // Predicated region
      $region9: #{tpu_custom_call.1} parent=5 // pred_check
        _
      $region10: #{tpu_custom_call.1} parent=5 // pred_check_branch
        %612 = sbr.rel (%p609) target = $region12
      $region11: #{tpu_custom_call.1} parent=5 // pred_region
        %s613 = ssub.s32 %s46, 1
        // Predicated region
        $region13: #{tpu_custom_call.1} parent=11 // pred_check
          %p614 = pneg %p67
        $region14: #{tpu_custom_call.1} parent=11 // pred_check_branch
          %616 = sbr.rel (%p614) target = $region16
        $region15: #{tpu_custom_call.1} parent=11 // pred_region
          _
        $region16: #{tpu_custom_call.1} parent=11 // pred_fallthru
          _
        // Predicated region
        $region17: #{tpu_custom_call.1} parent=11 // pred_check
          %p617 = pneg %p88
        $region18: #{tpu_custom_call.1} parent=11 // pred_check_branch
          %619 = sbr.rel (%p617) target = $region20
        $region19: #{tpu_custom_call.1} parent=11 // pred_region
          _
        $region20: #{tpu_custom_call.1} parent=11 // pred_fallthru
          _
        // Predicated region
        $region21: #{tpu_custom_call.1} parent=11 // pred_check
          %p620 = pneg %p109
        $region22: #{tpu_custom_call.1} parent=11 // pred_check_branch
          %622 = sbr.rel (%p620) target = $region24
        $region23: #{tpu_custom_call.1} parent=11 // pred_region
          _
        $region24: #{tpu_custom_call.1} parent=11 // pred_fallthru
          _
        // Predicated region
        $region25: #{tpu_custom_call.1} parent=11 // pred_check
          %p623 = pneg %p130
        $region26: #{tpu_custom_call.1} parent=11 // pred_check_branch
          %625 = sbr.rel (%p623) target = $region28
        $region27: #{tpu_custom_call.1} parent=11 // pred_region
          _
        $region28: #{tpu_custom_call.1} parent=11 // pred_fallthru
          _
        // Predicated region
        $region29: #{tpu_custom_call.1} parent=11 // pred_check
          %p626 = pneg %p151
        $region30: #{tpu_custom_call.1} parent=11 // pred_check_branch
          %628 = sbr.rel (%p626) target = $region32
        $region31: #{tpu_custom_call.1} parent=11 // pred_region
          _
        $region32: #{tpu_custom_call.1} parent=11 // pred_fallthru
          _
        // Predicated region
        $region33: #{tpu_custom_call.1} parent=11 // pred_check
          %p629 = pneg %p172
        $region34: #{tpu_custom_call.1} parent=11 // pred_check_branch
          %631 = sbr.rel (%p629) target = $region36
        $region35: #{tpu_custom_call.1} parent=11 // pred_region
          _
        $region36: #{tpu_custom_call.1} parent=11 // pred_fallthru
          _
        // Predicated region
        $region37: #{tpu_custom_call.1} parent=11 // pred_check
          %p632 = pneg %p193
        $region38: #{tpu_custom_call.1} parent=11 // pred_check_branch
          %634 = sbr.rel (%p632) target = $region40
        $region39: #{tpu_custom_call.1} parent=11 // pred_region
          _
        $region40: #{tpu_custom_call.1} parent=11 // pred_fallthru
          _
      $region12: #{tpu_custom_call.1} parent=5 // pred_fallthru
        _
      %p635 = scmp.lt.s32.totalorder %s46, 2
      // Predicated region
      $region41: #{tpu_custom_call.1} parent=5 // pred_check
        %p636 = pneg %p635
      $region42: #{tpu_custom_call.1} parent=5 // pred_check_branch
        %638 = sbr.rel (%p636) target = $region44
      $region43: #{tpu_custom_call.1} parent=5 // pred_region
        // Predicated region
        $region45: #{tpu_custom_call.1} parent=43 // pred_check
          %p639 = pneg %p213
        $region46: #{tpu_custom_call.1} parent=43 // pred_check_branch
          %641 = sbr.rel (%p639) target = $region48
        $region47: #{tpu_custom_call.1} parent=43 // pred_region
          %s642 = sand.u32 %s203, 1
          %s643 = scalar_lea.sflag [#allocation5], %s642
          %s644 = sand.u32 %s203, 1
          %s645 = smul.addr %s644, 64
          %s646 = scalar_lea.vmem [#allocation4], %s645
          %s648 = ssub.s32 1024, 1024
          %649 = vsyncadd %s643, %s648
          %s650 = smul.addr %s46, 16
          %s651 = smul.addr %s650, 64
          %s652 = scalar_lea.hbm %s7, %s651
          %s653 = sshll.u32 %s646, 4
          %s654 = int_to_ptr.vmem [resolvable:$true] %s653
          %659 = dma.hbm_to_vmem [thread:$0]  %s652, 1024, %s654, %s643, 64, 64, 4
        $region48: #{tpu_custom_call.1} parent=43 // pred_fallthru
          _
        // Predicated region
        $region49: #{tpu_custom_call.1} parent=43 // pred_check
          %p660 = pneg %p239
        $region50: #{tpu_custom_call.1} parent=43 // pred_check_branch
          %662 = sbr.rel (%p660) target = $region52
        $region51: #{tpu_custom_call.1} parent=43 // pred_region
          %s663 = sand.u32 %s46, 1
          %s664 = scalar_lea.sflag [#allocation8], %s663
          %s665 = sand.u32 %s229, 1
          %s666 = smul.addr %s665, 64
          %s667 = scalar_lea.vmem [#allocation7], %s666
          %s669 = ssub.s32 1024, 1024
          %670 = vsyncadd %s664, %s669
          %s671 = smul.addr %s46, 16
          %s672 = smul.addr %s671, 64
          %s673 = scalar_lea.hbm %s8, %s672
          %s674 = sshll.u32 %s667, 4
          %s675 = int_to_ptr.vmem [resolvable:$true] %s674
          %680 = dma.hbm_to_vmem [thread:$0]  %s673, 1024, %s675, %s664, 64, 64, 4
        $region52: #{tpu_custom_call.1} parent=43 // pred_fallthru
          _
        // Predicated region
        $region53: #{tpu_custom_call.1} parent=43 // pred_check
          %p681 = pneg %p265
        $region54: #{tpu_custom_call.1} parent=43 // pred_check_branch
          %683 = sbr.rel (%p681) target = $region56
        $region55: #{tpu_custom_call.1} parent=43 // pred_region
          %s684 = sand.u32 %s46, 1
          %s685 = scalar_lea.sflag [#allocation8], %s684
          %s686 = sand.u32 %s255, 1
          %s687 = smul.addr %s686, 64
          %s688 = scalar_lea.vmem [#allocation9], %s687
          %s690 = ssub.s32 1024, 1024
          %691 = vsyncadd %s685, %s690
          %s692 = smul.addr %s46, 16
          %s693 = smul.addr %s692, 64
          %s694 = scalar_lea.hbm %s9, %s693
          %s695 = sshll.u32 %s688, 4
          %s696 = int_to_ptr.vmem [resolvable:$true] %s695
          %701 = dma.hbm_to_vmem [thread:$0]  %s694, 1024, %s696, %s685, 64, 64, 4
        $region56: #{tpu_custom_call.1} parent=43 // pred_fallthru
          _
        // Predicated region
        $region57: #{tpu_custom_call.1} parent=43 // pred_check
          %p702 = pneg %p291
        $region58: #{tpu_custom_call.1} parent=43 // pred_check_branch
          %704 = sbr.rel (%p702) target = $region60
        $region59: #{tpu_custom_call.1} parent=43 // pred_region
          %p705 = scmp.lt.s32.totalorder %s46, 1
          %s706 = scalar_select %p705, %s46, 1
          %s707 = scalar_lea.vmem %s10, %s706
        $region60: #{tpu_custom_call.1} parent=43 // pred_fallthru
          _
        // Predicated region
        $region61: #{tpu_custom_call.1} parent=43 // pred_check
          %p708 = pneg %p317
        $region62: #{tpu_custom_call.1} parent=43 // pred_check_branch
          %710 = sbr.rel (%p708) target = $region64
        $region63: #{tpu_custom_call.1} parent=43 // pred_region
          %s711 = sand.u32 %s46, 1
          %s712 = scalar_lea.sflag [#allocation11], %s711
          %s713 = sand.u32 %s307, 1
          %s714 = smul.addr %s713, 64
          %s715 = scalar_lea.vmem [#allocation10], %s714
          %s717 = ssub.s32 1024, 1024
          %718 = vsyncadd %s712, %s717
          %s719 = smul.addr %s46, 16
          %s720 = smul.addr %s719, 64
          %s721 = scalar_lea.hbm %s11, %s720
          %s722 = sshll.u32 %s715, 4
          %s723 = int_to_ptr.vmem [resolvable:$true] %s722
          %728 = dma.hbm_to_vmem [thread:$0]  %s721, 1024, %s723, %s712, 64, 64, 4
        $region64: #{tpu_custom_call.1} parent=43 // pred_fallthru
          _
        // Predicated region
        $region65: #{tpu_custom_call.1} parent=43 // pred_check
          %p729 = pneg %p343
        $region66: #{tpu_custom_call.1} parent=43 // pred_check_branch
          %731 = sbr.rel (%p729) target = $region68
        $region67: #{tpu_custom_call.1} parent=43 // pred_region
          %s732 = sand.u32 %s46, 1
          %s733 = scalar_lea.sflag [#allocation11], %s732
          %s734 = sand.u32 %s333, 1
          %s735 = smul.addr %s734, 64
          %s736 = scalar_lea.vmem [#allocation12], %s735
          %s738 = ssub.s32 1024, 1024
          %739 = vsyncadd %s733, %s738
          %s740 = smul.addr %s46, 16
          %s741 = smul.addr %s740, 64
          %s742 = scalar_lea.hbm %s12, %s741
          %s743 = sshll.u32 %s736, 4
          %s744 = int_to_ptr.vmem [resolvable:$true] %s743
          %749 = dma.hbm_to_vmem [thread:$0]  %s742, 1024, %s744, %s733, 64, 64, 4
        $region68: #{tpu_custom_call.1} parent=43 // pred_fallthru
          _
        // Predicated region
        $region69: #{tpu_custom_call.1} parent=43 // pred_check
          %p750 = pneg %p369
        $region70: #{tpu_custom_call.1} parent=43 // pred_check_branch
          %752 = sbr.rel (%p750) target = $region72
        $region71: #{tpu_custom_call.1} parent=43 // pred_region
          %s753 = sand.u32 %s46, 1
          %s754 = scalar_lea.sflag [#allocation14], %s753
          %s755 = sand.u32 %s359, 1
          %s756 = smul.addr %s755, 64
          %s757 = scalar_lea.vmem [#allocation13], %s756
          %s759 = ssub.s32 1024, 1024
          %760 = vsyncadd %s754, %s759
          %s761 = smul.addr %s46, 16
          %s762 = smul.addr %s761, 64
          %s763 = scalar_lea.hbm %s13, %s762
          %s764 = sshll.u32 %s757, 4
          %s765 = int_to_ptr.vmem [resolvable:$true] %s764
          %770 = dma.hbm_to_vmem [thread:$0]  %s763, 1024, %s765, %s754, 64, 64, 4
        $region72: #{tpu_custom_call.1} parent=43 // pred_fallthru
          _
        // Predicated region
        $region73: #{tpu_custom_call.1} parent=43 // pred_check
          %p771 = pneg %p395
        $region74: #{tpu_custom_call.1} parent=43 // pred_check_branch
          %773 = sbr.rel (%p771) target = $region76
        $region75: #{tpu_custom_call.1} parent=43 // pred_region
          %p774 = scmp.lt.s32.totalorder %s46, 1
          %s775 = scalar_select %p774, %s46, 1
          %s776 = scalar_lea.vmem %s14, %s775
        $region76: #{tpu_custom_call.1} parent=43 // pred_fallthru
          _
        // Predicated region
        $region77: #{tpu_custom_call.1} parent=43 // pred_check
          %p777 = pneg %p421
        $region78: #{tpu_custom_call.1} parent=43 // pred_check_branch
          %779 = sbr.rel (%p777) target = $region80
        $region79: #{tpu_custom_call.1} parent=43 // pred_region
          %p780 = scmp.lt.s32.totalorder %s46, 1
          %s781 = scalar_select %p780, %s46, 1
          %s782 = scalar_lea.vmem %s15, %s781
        $region80: #{tpu_custom_call.1} parent=43 // pred_fallthru
          _
        // Predicated region
        $region81: #{tpu_custom_call.1} parent=43 // pred_check
          %p783 = pneg %p447
        $region82: #{tpu_custom_call.1} parent=43 // pred_check_branch
          %785 = sbr.rel (%p783) target = $region84
        $region83: #{tpu_custom_call.1} parent=43 // pred_region
          %p786 = scmp.lt.s32.totalorder %s46, 1
          %s787 = scalar_select %p786, %s46, 1
          %s788 = scalar_lea.vmem %s16, %s787
        $region84: #{tpu_custom_call.1} parent=43 // pred_fallthru
          _
        // Predicated region
        $region85: #{tpu_custom_call.1} parent=43 // pred_check
          %p789 = pneg %p473
        $region86: #{tpu_custom_call.1} parent=43 // pred_check_branch
          %791 = sbr.rel (%p789) target = $region88
        $region87: #{tpu_custom_call.1} parent=43 // pred_region
          %s792 = sand.u32 %s46, 1
          %s793 = scalar_lea.sflag [#allocation14], %s792
          %s794 = sand.u32 %s463, 1
          %s795 = smul.addr %s794, 64
          %s796 = scalar_lea.vmem [#allocation15], %s795
          %s798 = ssub.s32 1024, 1024
          %799 = vsyncadd %s793, %s798
          %s800 = smul.addr %s46, 16
          %s801 = smul.addr %s800, 64
          %s802 = scalar_lea.hbm %s17, %s801
          %s803 = sshll.u32 %s796, 4
          %s804 = int_to_ptr.vmem [resolvable:$true] %s803
          %809 = dma.hbm_to_vmem [thread:$0]  %s802, 1024, %s804, %s793, 64, 64, 4
        $region88: #{tpu_custom_call.1} parent=43 // pred_fallthru
          _
        // Predicated region
        $region89: #{tpu_custom_call.1} parent=43 // pred_check
          %p810 = pneg %p499
        $region90: #{tpu_custom_call.1} parent=43 // pred_check_branch
          %812 = sbr.rel (%p810) target = $region92
        $region91: #{tpu_custom_call.1} parent=43 // pred_region
          %p813 = scmp.lt.s32.totalorder %s46, 1
          %s814 = scalar_select %p813, %s46, 1
          %s815 = scalar_lea.vmem %s18, %s814
        $region92: #{tpu_custom_call.1} parent=43 // pred_fallthru
          _
        // Predicated region
        $region93: #{tpu_custom_call.1} parent=43 // pred_check
          %p816 = pneg %p525
        $region94: #{tpu_custom_call.1} parent=43 // pred_check_branch
          %818 = sbr.rel (%p816) target = $region96
        $region95: #{tpu_custom_call.1} parent=43 // pred_region
          %s819 = sand.u32 %s515, 1
          %s820 = scalar_lea.sflag [#allocation17], %s819
          %s821 = sand.u32 %s515, 1
          %s822 = smul.addr %s821, 64
          %s823 = scalar_lea.vmem [#allocation16], %s822
          %s825 = ssub.s32 1024, 1024
          %826 = vsyncadd %s820, %s825
          %s827 = smul.addr %s46, 16
          %s828 = smul.addr %s827, 64
          %s829 = scalar_lea.hbm %s19, %s828
          %s830 = sshll.u32 %s823, 4
          %s831 = int_to_ptr.vmem [resolvable:$true] %s830
          %836 = dma.hbm_to_vmem [thread:$0]  %s829, 1024, %s831, %s820, 64, 64, 4
        $region96: #{tpu_custom_call.1} parent=43 // pred_fallthru
          _
        // Predicated region
        $region97: #{tpu_custom_call.1} parent=43 // pred_check
          %p837 = pneg %p551
        $region98: #{tpu_custom_call.1} parent=43 // pred_check_branch
          %839 = sbr.rel (%p837) target = $region100
        $region99: #{tpu_custom_call.1} parent=43 // pred_region
          %p840 = scmp.lt.s32.totalorder %s46, 1
          %s841 = scalar_select %p840, %s46, 1
          %s842 = scalar_lea.vmem %s20, %s841
        $region100: #{tpu_custom_call.1} parent=43 // pred_fallthru
          _
      $region44: #{tpu_custom_call.1} parent=5 // pred_fallthru
        _
      %p843 = scmp.le.s32.totalorder 1, %s46
      %p844 = scmp.lt.s32.totalorder %s46, 3
      %p845 = pnand %p843, %p844
      %p846 = pneg %p845
      // Predicated region
      $region101: #{tpu_custom_call.1} parent=5 // pred_check
        _
      $region102: #{tpu_custom_call.1} parent=5 // pred_check_branch
        %848 = sbr.rel (%p845) target = $region104
      $region103: #{tpu_custom_call.1} parent=5 // pred_region
        %s849 = ssub.s32 %s46, 1
        %s850 = sand.u32 %s206, 1
        %s851 = scalar_lea.sflag [#allocation5], %s850
        %s852 = sand.u32 %s206, 1
        %s853 = smul.addr %s852, 64
        %s854 = scalar_lea.vmem [#allocation4], %s853
        // Predicated region
        $region105: #{tpu_custom_call.1} parent=103 // pred_check
          %p855 = pneg %p219
        $region106: #{tpu_custom_call.1} parent=103 // pred_check_branch
          %857 = sbr.rel (%p855) target = $region108
        $region107: #{tpu_custom_call.1} parent=103 // pred_region
          %858 = dma.done %s851, 1024
        $region108: #{tpu_custom_call.1} parent=103 // pred_fallthru
          _
        %s859 = sand.u32 %s51, 1
        %s860 = scalar_lea.sflag [#allocation8], %s859
        %s861 = sand.u32 %s232, 1
        %s862 = smul.addr %s861, 64
        %s863 = scalar_lea.vmem [#allocation7], %s862
        // Predicated region
        $region109: #{tpu_custom_call.1} parent=103 // pred_check
          %p864 = pneg %p245
        $region110: #{tpu_custom_call.1} parent=103 // pred_check_branch
          %866 = sbr.rel (%p864) target = $region112
        $region111: #{tpu_custom_call.1} parent=103 // pred_region
          %867 = dma.done %s860, 1024
        $region112: #{tpu_custom_call.1} parent=103 // pred_fallthru
          _
        %s868 = sand.u32 %s51, 1
        %s869 = scalar_lea.sflag [#allocation8], %s868
        %s870 = sand.u32 %s258, 1
        %s871 = smul.addr %s870, 64
        %s872 = scalar_lea.vmem [#allocation9], %s871
        // Predicated region
        $region113: #{tpu_custom_call.1} parent=103 // pred_check
          %p873 = pneg %p271
        $region114: #{tpu_custom_call.1} parent=103 // pred_check_branch
          %875 = sbr.rel (%p873) target = $region116
        $region115: #{tpu_custom_call.1} parent=103 // pred_region
          %876 = dma.done %s869, 1024
        $region116: #{tpu_custom_call.1} parent=103 // pred_fallthru
          _
        %s877 = sand.u32 %s51, 1
        %s878 = scalar_lea.sflag [#allocation11], %s877
        %s879 = sand.u32 %s310, 1
        %s880 = smul.addr %s879, 64
        %s881 = scalar_lea.vmem [#allocation10], %s880
        // Predicated region
        $region117: #{tpu_custom_call.1} parent=103 // pred_check
          %p882 = pneg %p323
        $region118: #{tpu_custom_call.1} parent=103 // pred_check_branch
          %884 = sbr.rel (%p882) target = $region120
        $region119: #{tpu_custom_call.1} parent=103 // pred_region
          %885 = dma.done %s878, 1024
        $region120: #{tpu_custom_call.1} parent=103 // pred_fallthru
          _
        %s886 = sand.u32 %s51, 1
        %s887 = scalar_lea.sflag [#allocation11], %s886
        %s888 = sand.u32 %s336, 1
        %s889 = smul.addr %s888, 64
        %s890 = scalar_lea.vmem [#allocation12], %s889
        // Predicated region
        $region121: #{tpu_custom_call.1} parent=103 // pred_check
          %p891 = pneg %p349
        $region122: #{tpu_custom_call.1} parent=103 // pred_check_branch
          %893 = sbr.rel (%p891) target = $region124
        $region123: #{tpu_custom_call.1} parent=103 // pred_region
          %894 = dma.done %s887, 1024
        $region124: #{tpu_custom_call.1} parent=103 // pred_fallthru
          _
        %s895 = sand.u32 %s51, 1
        %s896 = scalar_lea.sflag [#allocation14], %s895
        %s897 = sand.u32 %s362, 1
        %s898 = smul.addr %s897, 64
        %s899 = scalar_lea.vmem [#allocation13], %s898
        // Predicated region
        $region125: #{tpu_custom_call.1} parent=103 // pred_check
          %p900 = pneg %p375
        $region126: #{tpu_custom_call.1} parent=103 // pred_check_branch
          %902 = sbr.rel (%p900) target = $region128
        $region127: #{tpu_custom_call.1} parent=103 // pred_region
          %903 = dma.done %s896, 1024
        $region128: #{tpu_custom_call.1} parent=103 // pred_fallthru
          _
        %s904 = sand.u32 %s51, 1
        %s905 = scalar_lea.sflag [#allocation14], %s904
        %s906 = sand.u32 %s466, 1
        %s907 = smul.addr %s906, 64
        %s908 = scalar_lea.vmem [#allocation15], %s907
        // Predicated region
        $region129: #{tpu_custom_call.1} parent=103 // pred_check
          %p909 = pneg %p479
        $region130: #{tpu_custom_call.1} parent=103 // pred_check_branch
          %911 = sbr.rel (%p909) target = $region132
        $region131: #{tpu_custom_call.1} parent=103 // pred_region
          %912 = dma.done %s905, 1024
        $region132: #{tpu_custom_call.1} parent=103 // pred_fallthru
          _
        %s913 = sand.u32 %s518, 1
        %s914 = scalar_lea.sflag [#allocation17], %s913
        %s915 = sand.u32 %s518, 1
        %s916 = smul.addr %s915, 64
        %s917 = scalar_lea.vmem [#allocation16], %s916
        // Predicated region
        $region133: #{tpu_custom_call.1} parent=103 // pred_check
          %p918 = pneg %p531
        $region134: #{tpu_custom_call.1} parent=103 // pred_check_branch
          %920 = sbr.rel (%p918) target = $region136
        $region135: #{tpu_custom_call.1} parent=103 // pred_region
          %921 = dma.done %s914, 1024
        $region136: #{tpu_custom_call.1} parent=103 // pred_fallthru
          _
        %p922 = pneg %p67
        %p923 = pneg %p64
        %p924 = pneg %p88
        %p925 = pneg %p85
        %p926 = pneg %p109
        %p927 = pneg %p106
        %p928 = pneg %p130
        %p929 = pneg %p127
        %p930 = pneg %p151
        %p931 = pneg %p148
        %p932 = pneg %p172
        %p933 = pneg %p169
        %p934 = pneg %p193
        %p935 = pneg %p190
        %s936 = sand.u32 %s206, 1
        %s937 = scalar_lea.sflag [#allocation5], %s936
        %s938 = sand.u32 %s206, 1
        %s939 = smul.addr %s938, 64
        %s940 = scalar_lea.vmem [#allocation4], %s939
        %p941 = pneg %p219
        %p942 = pneg %p216
        %s943 = sand.u32 %s51, 1
        %s944 = scalar_lea.sflag [#allocation8], %s943
        %s945 = sand.u32 %s232, 1
        %s946 = smul.addr %s945, 64
        %s947 = scalar_lea.vmem [#allocation7], %s946
        %p948 = pneg %p245
        %p949 = pneg %p242
        %s950 = sand.u32 %s51, 1
        %s951 = scalar_lea.sflag [#allocation8], %s950
        %s952 = sand.u32 %s258, 1
        %s953 = smul.addr %s952, 64
        %s954 = scalar_lea.vmem [#allocation9], %s953
        %p955 = pneg %p271
        %p956 = pneg %p268
        %p957 = scmp.lt.s32.totalorder %s51, 1
        %s958 = scalar_select %p957, %s51, 1
        %s959 = scalar_lea.vmem %s10, %s958
        %p960 = pneg %p297
        %p961 = pneg %p294
        %s962 = sand.u32 %s51, 1
        %s963 = scalar_lea.sflag [#allocation11], %s962
        %s964 = sand.u32 %s310, 1
        %s965 = smul.addr %s964, 64
        %s966 = scalar_lea.vmem [#allocation10], %s965
        %p967 = pneg %p323
        %p968 = pneg %p320
        %s969 = sand.u32 %s51, 1
        %s970 = scalar_lea.sflag [#allocation11], %s969
        %s971 = sand.u32 %s336, 1
        %s972 = smul.addr %s971, 64
        %s973 = scalar_lea.vmem [#allocation12], %s972
        %p974 = pneg %p349
        %p975 = pneg %p346
        %s976 = sand.u32 %s51, 1
        %s977 = scalar_lea.sflag [#allocation14], %s976
        %s978 = sand.u32 %s362, 1
        %s979 = smul.addr %s978, 64
        %s980 = scalar_lea.vmem [#allocation13], %s979
        %p981 = pneg %p375
        %p982 = pneg %p372
        %p983 = scmp.lt.s32.totalorder %s51, 1
        %s984 = scalar_select %p983, %s51, 1
        %s985 = scalar_lea.vmem %s14, %s984
        %p986 = pneg %p401
        %p987 = pneg %p398
        %p988 = scmp.lt.s32.totalorder %s51, 1
        %s989 = scalar_select %p988, %s51, 1
        %s990 = scalar_lea.vmem %s15, %s989
        %p991 = pneg %p427
        %p992 = pneg %p424
        %p993 = scmp.lt.s32.totalorder %s51, 1
        %s994 = scalar_select %p993, %s51, 1
        %s995 = scalar_lea.vmem %s16, %s994
        %p996 = pneg %p453
        %p997 = pneg %p450
        %s998 = sand.u32 %s51, 1
        %s999 = scalar_lea.sflag [#allocation14], %s998
        %s1000 = sand.u32 %s466, 1
        %s1001 = smul.addr %s1000, 64
        %s1002 = scalar_lea.vmem [#allocation15], %s1001
        %p1003 = pneg %p479
        %p1004 = pneg %p476
        %p1005 = scmp.lt.s32.totalorder %s51, 1
        %s1006 = scalar_select %p1005, %s51, 1
        %s1007 = scalar_lea.vmem %s18, %s1006
        %p1008 = pneg %p505
        %p1009 = pneg %p502
        %s1010 = sand.u32 %s518, 1
        %s1011 = scalar_lea.sflag [#allocation17], %s1010
        %s1012 = sand.u32 %s518, 1
        %s1013 = smul.addr %s1012, 64
        %s1014 = scalar_lea.vmem [#allocation16], %s1013
        %p1015 = pneg %p531
        %p1016 = pneg %p528
        %p1017 = scmp.lt.s32.totalorder %s51, 1
        %s1018 = scalar_select %p1017, %s51, 1
        %s1019 = scalar_lea.vmem %s20, %s1018
        %p1020 = pneg %p557
        %p1021 = pneg %p554
        %p1022 = pneg %p578
        %p1023 = pneg %p575
        %p1024 = pneg %p599
        %p1025 = pneg %p596
        %p1026 = scmp.lt.s32.totalorder %s51, 1
        %s1027 = scalar_select %p1026, %s51, 1
        %s1028 = scalar_lea.vmem %s10, %s1027
        %p1029 = scmp.lt.s32.totalorder %s51, 1
        %s1030 = scalar_select %p1029, %s51, 1
        %s1031 = scalar_lea.vmem %s14, %s1030
        %p1032 = scmp.lt.s32.totalorder %s51, 1
        %s1033 = scalar_select %p1032, %s51, 1
        %s1034 = scalar_lea.vmem %s15, %s1033
        %p1035 = scmp.lt.s32.totalorder %s51, 1
        %s1036 = scalar_select %p1035, %s51, 1
        %s1037 = scalar_lea.vmem %s16, %s1036
        %p1038 = scmp.lt.s32.totalorder %s51, 1
        %s1039 = scalar_select %p1038, %s51, 1
        %s1040 = scalar_lea.vmem %s18, %s1039
        %p1041 = scmp.lt.s32.totalorder %s51, 1
        %s1042 = scalar_select %p1041, %s51, 1
        %s1043 = scalar_lea.vmem %s20, %s1042
        %p1045 = scmp.eq.s32.totalorder %s51, 0
        // Predicated region
        $region137: #{tpu_custom_call.1} parent=103 // pred_check
          %p1046 = pneg %p1045
        $region138: #{tpu_custom_call.1} parent=103 // pred_check_branch
          %1048 = sbr.rel (%p1046) target = $region140
        $region139: #{tpu_custom_call.1} parent=103 // pred_region
          %v1049 = vld [vmem:[%s5] sm:$0xff]
          %1050 = vst [vmem:[#allocation2] sm:$0xff] %v1049
          %v1051 = vld [vmem:[%s6] sm:$0xff]
          %v1052 = vld [vmem:[%s6 + $0x8] sm:$0xff]
          %1053 = vst [vmem:[#allocation3] sm:$0xff] %v1051
          %1054 = vst [vmem:[#allocation3 + $0x8] sm:$0xff] %v1052
        $region140: #{tpu_custom_call.1} parent=103 // pred_fallthru
          _
        %v1055 = vld [vmem:[#allocation2] sm:$0xff]
        %v1056 = vld [vmem:[#allocation3] sm:$0xff]
        %v1057 = vld [vmem:[#allocation3 + $0x8] sm:$0xff]
        %v1058 = vlaneseq
        %v1059 = vand.u32 %v1058, 127
        %v1060 = vld [vmem:[%s0] sm:$0xff]
        %v1061 = vld [vmem:[%s0 + $0x8] sm:$0xff]
        %1062 = vset.pattern.permute.xlu0 0
        %1063 = vperm.xlu0 %1062, %v1060
        %v1064 = vpop.permute.xlu0 %1063
        %1065 = vset.pattern.permute.xlu0 0
        %1066 = vperm.xlu0 %1065, %v1061
        %v1067 = vpop.permute.xlu0 %1066
        %vm1068 = vcmp.eq.s32.totalorder %v1059, %v1064
        %vm1069 = vcmp.eq.s32.totalorder %v1059, %v1067
        %v1070 = vsel %vm1068, 1, 0
        %v1071 = vsel %vm1069, 1, 0
        %v1072 = vcvt.s32.f32 %v1070
        %v1073 = vcvt.s32.f32 %v1071
        %v1074 = vld [vmem:[%s1] sm:$0xff]
        %v1075 = vld [vmem:[%s1 + $0x8] sm:$0xff]
        %1076 = vset.pattern.permute.xlu0 0
        %1077 = vperm.xlu0 %1076, %v1074
        %v1078 = vpop.permute.xlu0 %1077
        %1079 = vset.pattern.permute.xlu0 0
        %1080 = vperm.xlu0 %1079, %v1075
        %v1081 = vpop.permute.xlu0 %1080
        %vm1082 = vcmp.eq.s32.totalorder %v1059, %v1078
        %vm1083 = vcmp.eq.s32.totalorder %v1059, %v1081
        %v1084 = vsel %vm1082, 1, 0
        %v1085 = vsel %vm1083, 1, 0
        %v1086 = vcvt.s32.f32 %v1084
        %v1087 = vcvt.s32.f32 %v1085
        %v1088 = vlaneseq
        %v1089 = vshrl.u32 %v1088, 7
        %v1090 = vld [vmem:[%s2] sm:$0x1]
        %v1091 = vlaneseq
        %v1092 = vshrl.u32 %v1091, 7
        %v1093 = vsub.s32 0, %v1092
        %v1094 = vrot.slane %v1090, %v1093
        %vm1095 = vcmp.eq.s32.totalorder %v1089, %v1094
        %v1096 = vsel %vm1095, 1, 0
        %v1097 = vcvt.s32.f32 %v1096
        %v1098 = vld [vmem:[%s3] sm:$0x1]
        %v1099 = vlaneseq
        %v1100 = vshrl.u32 %v1099, 7
        %v1101 = vsub.s32 0, %v1100
        %v1102 = vrot.slane %v1098, %v1101
        %vm1103 = vcmp.eq.s32.totalorder %v1089, %v1102
        %v1104 = vsel %vm1103, 1, 0
        %v1105 = vcvt.s32.f32 %v1104
        %v1106 = vpack.c.bf16 %v1055, %v1055
        %v1107 = vld [vmem:[%s854] sm:$0xf]
        %v1108 = vld [vmem:[%s854 + $0x4] sm:$0xf]
        %v1109 = vld [vmem:[%s854 + $0x8] sm:$0xf]
        %v1110 = vld [vmem:[%s854 + $0xc] sm:$0xf]
        %v1111 = vld [vmem:[%s854 + $0x10] sm:$0xf]
        %v1112 = vld [vmem:[%s854 + $0x14] sm:$0xf]
        %v1113 = vld [vmem:[%s854 + $0x18] sm:$0xf]
        %v1114 = vld [vmem:[%s854 + $0x1c] sm:$0xf]
        %v1115 = vld [vmem:[%s854 + $0x20] sm:$0xf]
        %v1116 = vld [vmem:[%s854 + $0x24] sm:$0xf]
        %v1117 = vld [vmem:[%s854 + $0x28] sm:$0xf]
        %v1118 = vld [vmem:[%s854 + $0x2c] sm:$0xf]
        %v1119 = vld [vmem:[%s854 + $0x30] sm:$0xf]
        %v1120 = vld [vmem:[%s854 + $0x34] sm:$0xf]
        %v1121 = vld [vmem:[%s854 + $0x38] sm:$0xf]
        %v1122 = vld [vmem:[%s854 + $0x3c] sm:$0xf]
        %v1139 = vunpack.c.l.b16 %v1107
        %v1140 = vunpack.c.l.b16 %v1108
        %v1141 = vunpack.c.l.b16 %v1109
        %v1142 = vunpack.c.l.b16 %v1110
        %v1143 = vunpack.c.l.b16 %v1111
        %v1144 = vunpack.c.l.b16 %v1112
        %v1145 = vunpack.c.l.b16 %v1113
        %v1146 = vunpack.c.l.b16 %v1114
        %v1147 = vunpack.c.l.b16 %v1115
        %v1148 = vunpack.c.l.b16 %v1116
        %v1149 = vunpack.c.l.b16 %v1117
        %v1150 = vunpack.c.l.b16 %v1118
        %v1151 = vunpack.c.l.b16 %v1119
        %v1152 = vunpack.c.l.b16 %v1120
        %v1153 = vunpack.c.l.b16 %v1121
        %v1154 = vunpack.c.l.b16 %v1122
        %v1155 = vpack.c.b16 %v1140, %v1139
        %v1156 = vpack.c.b16 %v1142, %v1141
        %v1157 = vpack.c.b16 %v1144, %v1143
        %v1158 = vpack.c.b16 %v1146, %v1145
        %v1159 = vpack.c.b16 %v1148, %v1147
        %v1160 = vpack.c.b16 %v1150, %v1149
        %v1161 = vpack.c.b16 %v1152, %v1151
        %v1162 = vpack.c.b16 %v1154, %v1153
        %1171 = vmatprep.subr.bf16.mxu0 0
        %1172 = vmatpush1.bf16.msra.mxu0 %v1162
        %1173 = vmatprep.subr.bf16.mxu0 0
        %1174 = vmatpush1.bf16.msra.mxu0 %v1161
        %1175 = vmatprep.subr.bf16.mxu0 0
        %1176 = vmatpush1.bf16.msra.mxu0 %v1160
        %1177 = vmatprep.subr.bf16.mxu0 0
        %1178 = vmatpush1.bf16.msra.mxu0 %v1159
        %1179 = vmatprep.subr.bf16.mxu0 0
        %1180 = vmatpush1.bf16.msra.mxu0 %v1158
        %1181 = vmatprep.subr.bf16.mxu0 0
        %1182 = vmatpush1.bf16.msra.mxu0 %v1157
        %1183 = vmatprep.subr.bf16.mxu0 0
        %1184 = vmatpush1.bf16.msra.mxu0 %v1156
        %1185 = vmatprep.subr.bf16.mxu0 0
        %1186 = vmatpush1.bf16.msra.mxu0 %v1155
        %1187 = vmatprep.subr.bf16.mxu0 0
        %1188 = vmatpush2.bf16.msra.mxu0 0
        %1189 = vmatprep.subr.bf16.mxu0 0
        %1190 = vmatpush2.bf16.msra.mxu0 0
        %1191 = vmatprep.subr.bf16.mxu0 0
        %1192 = vmatpush2.bf16.msra.mxu0 0
        %1193 = vmatprep.subr.bf16.mxu0 0
        %1194 = vmatpush2.bf16.msra.mxu0 0
        %1195 = vmatprep.subr.bf16.mxu0 0
        %1196 = vmatpush2.bf16.msra.mxu0 0
        %1197 = vmatprep.subr.bf16.mxu0 0
        %1198 = vmatpush2.bf16.msra.mxu0 0
        %1199 = vmatprep.subr.bf16.mxu0 0
        %1200 = vmatpush2.bf16.msra.mxu0 0
        %1201 = vmatprep.subr.bf16.mxu0 0
        %1202 = vmatpush2.bf16.msra.mxu0 0
        %1203 = vmatprep.mubr.bf16.mxu0 0
        %1204 = vmatmul.mubr.bf16.gmra.mxu0 %v1106
        %v1205 = vpop.f32.mrf.mxu0
        %v1206 = vadd.f32 0.0, %v1205
        %v1207 = vpop.f32.mrf.mxu0
        %v1208 = vpop.f32.mrf.mxu0
        %v1209 = vpop.f32.mrf.mxu0
        %1210 = vdwg.mxu0
        %v1211 = vld [vmem:[%s872] sm:$0xf]
        %v1212 = vld [vmem:[%s872 + $0x4] sm:$0xf]
        %v1213 = vld [vmem:[%s872 + $0x8] sm:$0xf]
        %v1214 = vld [vmem:[%s872 + $0xc] sm:$0xf]
        %v1215 = vld [vmem:[%s872 + $0x10] sm:$0xf]
        %v1216 = vld [vmem:[%s872 + $0x14] sm:$0xf]
        %v1217 = vld [vmem:[%s872 + $0x18] sm:$0xf]
        %v1218 = vld [vmem:[%s872 + $0x1c] sm:$0xf]
        %v1219 = vld [vmem:[%s872 + $0x20] sm:$0xf]
        %v1220 = vld [vmem:[%s872 + $0x24] sm:$0xf]
        %v1221 = vld [vmem:[%s872 + $0x28] sm:$0xf]
        %v1222 = vld [vmem:[%s872 + $0x2c] sm:$0xf]
        %v1223 = vld [vmem:[%s872 + $0x30] sm:$0xf]
        %v1224 = vld [vmem:[%s872 + $0x34] sm:$0xf]
        %v1225 = vld [vmem:[%s872 + $0x38] sm:$0xf]
        %v1226 = vld [vmem:[%s872 + $0x3c] sm:$0xf]
        %v1243 = vunpack.c.l.b16 %v1211
        %v1244 = vunpack.c.l.b16 %v1212
        %v1245 = vunpack.c.l.b16 %v1213
        %v1246 = vunpack.c.l.b16 %v1214
        %v1247 = vunpack.c.l.b16 %v1215
        %v1248 = vunpack.c.l.b16 %v1216
        %v1249 = vunpack.c.l.b16 %v1217
        %v1250 = vunpack.c.l.b16 %v1218
        %v1251 = vunpack.c.l.b16 %v1219
        %v1252 = vunpack.c.l.b16 %v1220
        %v1253 = vunpack.c.l.b16 %v1221
        %v1254 = vunpack.c.l.b16 %v1222
        %v1255 = vunpack.c.l.b16 %v1223
        %v1256 = vunpack.c.l.b16 %v1224
        %v1257 = vunpack.c.l.b16 %v1225
        %v1258 = vunpack.c.l.b16 %v1226
        %v1259 = vpack.c.b16 %v1244, %v1243
        %v1260 = vpack.c.b16 %v1246, %v1245
        %v1261 = vpack.c.b16 %v1248, %v1247
        %v1262 = vpack.c.b16 %v1250, %v1249
        %v1263 = vpack.c.b16 %v1252, %v1251
        %v1264 = vpack.c.b16 %v1254, %v1253
        %v1265 = vpack.c.b16 %v1256, %v1255
        %v1266 = vpack.c.b16 %v1258, %v1257
        %1275 = vmatprep.subr.bf16.mxu0 0
        %1276 = vmatpush1.bf16.msra.mxu0 %v1266
        %1277 = vmatprep.subr.bf16.mxu0 0
        %1278 = vmatpush1.bf16.msra.mxu0 %v1265
        %1279 = vmatprep.subr.bf16.mxu0 0
        %1280 = vmatpush1.bf16.msra.mxu0 %v1264
        %1281 = vmatprep.subr.bf16.mxu0 0
        %1282 = vmatpush1.bf16.msra.mxu0 %v1263
        %1283 = vmatprep.subr.bf16.mxu0 0
        %1284 = vmatpush1.bf16.msra.mxu0 %v1262
        %1285 = vmatprep.subr.bf16.mxu0 0
        %1286 = vmatpush1.bf16.msra.mxu0 %v1261
        %1287 = vmatprep.subr.bf16.mxu0 0
        %1288 = vmatpush1.bf16.msra.mxu0 %v1260
        %1289 = vmatprep.subr.bf16.mxu0 0
        %1290 = vmatpush1.bf16.msra.mxu0 %v1259
        %1291 = vmatprep.subr.bf16.mxu0 0
        %1292 = vmatpush2.bf16.msra.mxu0 0
        %1293 = vmatprep.subr.bf16.mxu0 0
        %1294 = vmatpush2.bf16.msra.mxu0 0
        %1295 = vmatprep.subr.bf16.mxu0 0
        %1296 = vmatpush2.bf16.msra.mxu0 0
        %1297 = vmatprep.subr.bf16.mxu0 0
        %1298 = vmatpush2.bf16.msra.mxu0 0
        %1299 = vmatprep.subr.bf16.mxu0 0
        %1300 = vmatpush2.bf16.msra.mxu0 0
        %1301 = vmatprep.subr.bf16.mxu0 0
        %1302 = vmatpush2.bf16.msra.mxu0 0
        %1303 = vmatprep.subr.bf16.mxu0 0
        %1304 = vmatpush2.bf16.msra.mxu0 0
        %1305 = vmatprep.subr.bf16.mxu0 0
        %1306 = vmatpush2.bf16.msra.mxu0 0
        %1307 = vmatprep.mubr.bf16.mxu0 0
        %1308 = vmatmul.mubr.bf16.gmra.mxu0 %v1106
        %v1309 = vpop.f32.mrf.mxu0
        %v1310 = vadd.f32 0.0, %v1309
        %v1311 = vpop.f32.mrf.mxu0
        %v1312 = vpop.f32.mrf.mxu0
        %v1313 = vpop.f32.mrf.mxu0
        %1314 = vdwg.mxu0
        %v1315 = vpack.c.bf16 %v1057, %v1056
        %v1316 = vld [vmem:[%s863] sm:$0xf]
        %v1317 = vld [vmem:[%s863 + $0x4] sm:$0xf]
        %v1318 = vld [vmem:[%s863 + $0x8] sm:$0xf]
        %v1319 = vld [vmem:[%s863 + $0xc] sm:$0xf]
        %v1320 = vld [vmem:[%s863 + $0x10] sm:$0xf]
        %v1321 = vld [vmem:[%s863 + $0x14] sm:$0xf]
        %v1322 = vld [vmem:[%s863 + $0x18] sm:$0xf]
        %v1323 = vld [vmem:[%s863 + $0x1c] sm:$0xf]
        %v1324 = vld [vmem:[%s863 + $0x20] sm:$0xf]
        %v1325 = vld [vmem:[%s863 + $0x24] sm:$0xf]
        %v1326 = vld [vmem:[%s863 + $0x28] sm:$0xf]
        %v1327 = vld [vmem:[%s863 + $0x2c] sm:$0xf]
        %v1328 = vld [vmem:[%s863 + $0x30] sm:$0xf]
        %v1329 = vld [vmem:[%s863 + $0x34] sm:$0xf]
        %v1330 = vld [vmem:[%s863 + $0x38] sm:$0xf]
        %v1331 = vld [vmem:[%s863 + $0x3c] sm:$0xf]
        %v1348 = vunpack.c.l.b16 %v1316
        %v1349 = vunpack.c.l.b16 %v1317
        %v1350 = vunpack.c.l.b16 %v1318
        %v1351 = vunpack.c.l.b16 %v1319
        %v1352 = vunpack.c.l.b16 %v1320
        %v1353 = vunpack.c.l.b16 %v1321
        %v1354 = vunpack.c.l.b16 %v1322
        %v1355 = vunpack.c.l.b16 %v1323
        %v1356 = vunpack.c.l.b16 %v1324
        %v1357 = vunpack.c.l.b16 %v1325
        %v1358 = vunpack.c.l.b16 %v1326
        %v1359 = vunpack.c.l.b16 %v1327
        %v1360 = vunpack.c.l.b16 %v1328
        %v1361 = vunpack.c.l.b16 %v1329
        %v1362 = vunpack.c.l.b16 %v1330
        %v1363 = vunpack.c.l.b16 %v1331
        %v1364 = vpack.c.b16 %v1349, %v1348
        %v1365 = vpack.c.b16 %v1351, %v1350
        %v1366 = vpack.c.b16 %v1353, %v1352
        %v1367 = vpack.c.b16 %v1355, %v1354
        %v1368 = vpack.c.b16 %v1357, %v1356
        %v1369 = vpack.c.b16 %v1359, %v1358
        %v1370 = vpack.c.b16 %v1361, %v1360
        %v1371 = vpack.c.b16 %v1363, %v1362
        %1380 = vmatprep.subr.bf16.mxu0 0
        %1381 = vmatpush1.bf16.msra.mxu0 %v1371
        %1382 = vmatprep.subr.bf16.mxu0 0
        %1383 = vmatpush1.bf16.msra.mxu0 %v1370
        %1384 = vmatprep.subr.bf16.mxu0 0
        %1385 = vmatpush1.bf16.msra.mxu0 %v1369
        %1386 = vmatprep.subr.bf16.mxu0 0
        %1387 = vmatpush1.bf16.msra.mxu0 %v1368
        %1388 = vmatprep.subr.bf16.mxu0 0
        %1389 = vmatpush1.bf16.msra.mxu0 %v1367
        %1390 = vmatprep.subr.bf16.mxu0 0
        %1391 = vmatpush1.bf16.msra.mxu0 %v1366
        %1392 = vmatprep.subr.bf16.mxu0 0
        %1393 = vmatpush1.bf16.msra.mxu0 %v1365
        %1394 = vmatprep.subr.bf16.mxu0 0
        %1395 = vmatpush1.bf16.msra.mxu0 %v1364
        %1396 = vmatprep.subr.bf16.mxu0 0
        %1397 = vmatpush2.bf16.msra.mxu0 0
        %1398 = vmatprep.subr.bf16.mxu0 0
        %1399 = vmatpush2.bf16.msra.mxu0 0
        %1400 = vmatprep.subr.bf16.mxu0 0
        %1401 = vmatpush2.bf16.msra.mxu0 0
        %1402 = vmatprep.subr.bf16.mxu0 0
        %1403 = vmatpush2.bf16.msra.mxu0 0
        %1404 = vmatprep.subr.bf16.mxu0 0
        %1405 = vmatpush2.bf16.msra.mxu0 0
        %1406 = vmatprep.subr.bf16.mxu0 0
        %1407 = vmatpush2.bf16.msra.mxu0 0
        %1408 = vmatprep.subr.bf16.mxu0 0
        %1409 = vmatpush2.bf16.msra.mxu0 0
        %1410 = vmatprep.subr.bf16.mxu0 0
        %1411 = vmatpush2.bf16.msra.mxu0 0
        %1412 = vmatprep.mubr.bf16.mxu0 0
        %1413 = vmatmul.mubr.bf16.gmra.mxu0 %v1315
        %v1414 = vpop.f32.mrf.mxu0
        %v1415 = vadd.f32 0.0, %v1414
        %v1416 = vpop.f32.mrf.mxu0
        %v1417 = vpop.f32.mrf.mxu0
        %v1418 = vadd.f32 0.0, %v1417
        %v1419 = vpop.f32.mrf.mxu0
        %1420 = vdwg.mxu0
        %vm1421 = vcmask 64512
        %v1423 = vsel %vm1421, %v1072, 0
        %v1426 = vsel %vm1421, %v1073, 0
        %1428 = vmatprep.subr.mxu0 0.0
        %1429 = vmatpush1.msra.mxu0 0.0
        %1430 = vmatprep.subr.mxu0 0.0
        %1431 = vmatpush1.msra.mxu0 0.0
        %1432 = vmatprep.subr.mxu0 0.0
        %1433 = vmatpush1.msra.mxu0 0.0
        %1434 = vmatprep.subr.mxu0 0.0
        %1435 = vmatpush1.msra.mxu0 0.0
        %1436 = vmatprep.subr.mxu0 0.0
        %1437 = vmatpush1.msra.mxu0 0.0
        %1438 = vmatprep.subr.mxu0 0.0
        %1439 = vmatpush1.msra.mxu0 0.0
        %1440 = vmatprep.subr.mxu0 0.0
        %1441 = vmatpush1.msra.mxu0 0.0
        %1442 = vmatprep.subr.mxu0 0.0
        %1443 = vmatpush1.msra.mxu0 0.0
        %1444 = vmatprep.subr.mxu0 0.0
        %1445 = vmatpush1.msra.mxu0 0.0
        %1446 = vmatprep.subr.mxu0 0.0
        %1447 = vmatpush1.msra.mxu0 0.0
        %1448 = vmatprep.subr.mxu0 0.0
        %1449 = vmatpush1.msra.mxu0 0.0
        %1450 = vmatprep.subr.mxu0 0.0
        %1451 = vmatpush1.msra.mxu0 0.0
        %1452 = vmatprep.subr.mxu0 0.0
        %1453 = vmatpush1.msra.mxu0 0.0
        %1454 = vmatprep.subr.mxu0 0.0
        %1455 = vmatpush1.msra.mxu0 0.0
        %1456 = vmatprep.subr.mxu0 0.0
        %1457 = vmatpush1.msra.mxu0 0.0
        %1458 = vmatprep.subr.mxu0 0.0
        %1459 = vmatpush1.msra.mxu0 %v1206
        %1460 = vmatprep.subr.mxu0 0.0
        %1461 = vmatpush2.msra.mxu0 0.0
        %1462 = vmatprep.subr.mxu0 0.0
        %1463 = vmatpush2.msra.mxu0 0.0
        %1464 = vmatprep.subr.mxu0 0.0
        %1465 = vmatpush2.msra.mxu0 0.0
        %1466 = vmatprep.subr.mxu0 0.0
        %1467 = vmatpush2.msra.mxu0 0.0
        %1468 = vmatprep.subr.mxu0 0.0
        %1469 = vmatpush2.msra.mxu0 0.0
        %1470 = vmatprep.subr.mxu0 0.0
        %1471 = vmatpush2.msra.mxu0 0.0
        %1472 = vmatprep.subr.mxu0 0.0
        %1473 = vmatpush2.msra.mxu0 0.0
        %1474 = vmatprep.subr.mxu0 0.0
        %1475 = vmatpush2.msra.mxu0 0.0
        %1476 = vmatprep.subr.mxu0 0.0
        %1477 = vmatpush2.msra.mxu0 0.0
        %1478 = vmatprep.subr.mxu0 0.0
        %1479 = vmatpush2.msra.mxu0 0.0
        %1480 = vmatprep.subr.mxu0 0.0
        %1481 = vmatpush2.msra.mxu0 0.0
        %1482 = vmatprep.subr.mxu0 0.0
        %1483 = vmatpush2.msra.mxu0 0.0
        %1484 = vmatprep.subr.mxu0 0.0
        %1485 = vmatpush2.msra.mxu0 0.0
        %1486 = vmatprep.subr.mxu0 0.0
        %1487 = vmatpush2.msra.mxu0 0.0
        %1488 = vmatprep.subr.mxu0 0.0
        %1489 = vmatpush2.msra.mxu0 0.0
        %1490 = vmatprep.subr.mxu0 0.0
        %1491 = vmatpush2.msra.mxu0 0.0
        %1492 = vmatprep.mubr.f32.mxu0 0.0
        %1493 = vmatmul.mubr.f32.gmra.mxu0 %v1423
        %v1494 = vpop.f32.mrf.mxu0
        %v1495 = vadd.f32 %v1415, %v1494
        %v1496 = vpop.f32.mrf.mxu0
        %1497 = vmatprep.mubr.f32.mxu0 0.0
        %1498 = vmatmul.mubr.f32.gmra.mxu0 %v1426
        %v1499 = vpop.f32.mrf.mxu0
        %v1500 = vadd.f32 %v1418, %v1499
        %v1501 = vpop.f32.mrf.mxu0
        %1502 = vdwg.mxu0
        %v1504 = vsel %vm1421, %v1086, 0
        %v1507 = vsel %vm1421, %v1087, 0
        %1509 = vmatprep.subr.mxu0 0.0
        %1510 = vmatpush1.msra.mxu0 0.0
        %1511 = vmatprep.subr.mxu0 0.0
        %1512 = vmatpush1.msra.mxu0 0.0
        %1513 = vmatprep.subr.mxu0 0.0
        %1514 = vmatpush1.msra.mxu0 0.0
        %1515 = vmatprep.subr.mxu0 0.0
        %1516 = vmatpush1.msra.mxu0 0.0
        %1517 = vmatprep.subr.mxu0 0.0
        %1518 = vmatpush1.msra.mxu0 0.0
        %1519 = vmatprep.subr.mxu0 0.0
        %1520 = vmatpush1.msra.mxu0 0.0
        %1521 = vmatprep.subr.mxu0 0.0
        %1522 = vmatpush1.msra.mxu0 0.0
        %1523 = vmatprep.subr.mxu0 0.0
        %1524 = vmatpush1.msra.mxu0 0.0
        %1525 = vmatprep.subr.mxu0 0.0
        %1526 = vmatpush1.msra.mxu0 0.0
        %1527 = vmatprep.subr.mxu0 0.0
        %1528 = vmatpush1.msra.mxu0 0.0
        %1529 = vmatprep.subr.mxu0 0.0
        %1530 = vmatpush1.msra.mxu0 0.0
        %1531 = vmatprep.subr.mxu0 0.0
        %1532 = vmatpush1.msra.mxu0 0.0
        %1533 = vmatprep.subr.mxu0 0.0
        %1534 = vmatpush1.msra.mxu0 0.0
        %1535 = vmatprep.subr.mxu0 0.0
        %1536 = vmatpush1.msra.mxu0 0.0
        %1537 = vmatprep.subr.mxu0 0.0
        %1538 = vmatpush1.msra.mxu0 0.0
        %1539 = vmatprep.subr.mxu0 0.0
        %1540 = vmatpush1.msra.mxu0 %v1310
        %1541 = vmatprep.subr.mxu0 0.0
        %1542 = vmatpush2.msra.mxu0 0.0
        %1543 = vmatprep.subr.mxu0 0.0
        %1544 = vmatpush2.msra.mxu0 0.0
        %1545 = vmatprep.subr.mxu0 0.0
        %1546 = vmatpush2.msra.mxu0 0.0
        %1547 = vmatprep.subr.mxu0 0.0
        %1548 = vmatpush2.msra.mxu0 0.0
        %1549 = vmatprep.subr.mxu0 0.0
        %1550 = vmatpush2.msra.mxu0 0.0
        %1551 = vmatprep.subr.mxu0 0.0
        %1552 = vmatpush2.msra.mxu0 0.0
        %1553 = vmatprep.subr.mxu0 0.0
        %1554 = vmatpush2.msra.mxu0 0.0
        %1555 = vmatprep.subr.mxu0 0.0
        %1556 = vmatpush2.msra.mxu0 0.0
        %1557 = vmatprep.subr.mxu0 0.0
        %1558 = vmatpush2.msra.mxu0 0.0
        %1559 = vmatprep.subr.mxu0 0.0
        %1560 = vmatpush2.msra.mxu0 0.0
        %1561 = vmatprep.subr.mxu0 0.0
        %1562 = vmatpush2.msra.mxu0 0.0
        %1563 = vmatprep.subr.mxu0 0.0
        %1564 = vmatpush2.msra.mxu0 0.0
        %1565 = vmatprep.subr.mxu0 0.0
        %1566 = vmatpush2.msra.mxu0 0.0
        %1567 = vmatprep.subr.mxu0 0.0
        %1568 = vmatpush2.msra.mxu0 0.0
        %1569 = vmatprep.subr.mxu0 0.0
        %1570 = vmatpush2.msra.mxu0 0.0
        %1571 = vmatprep.subr.mxu0 0.0
        %1572 = vmatpush2.msra.mxu0 0.0
        %1573 = vmatprep.mubr.f32.mxu0 0.0
        %1574 = vmatmul.mubr.f32.gmra.mxu0 %v1504
        %v1575 = vpop.f32.mrf.mxu0
        %v1576 = vadd.f32 0.0, %v1575
        %v1577 = vpop.f32.mrf.mxu0
        %1578 = vmatprep.mubr.f32.mxu0 0.0
        %1579 = vmatmul.mubr.f32.gmra.mxu0 %v1507
        %v1580 = vpop.f32.mrf.mxu0
        %v1581 = vadd.f32 0.0, %v1580
        %v1582 = vpop.f32.mrf.mxu0
        %1583 = vdwg.mxu0
        %v1584 = vadd.f32 %v1495, %v1576
        %v1585 = vadd.f32 %v1500, %v1581
        %v1586 = vld [vmem:[%s1028] sm:$0x1]
        %v1588 = vlaneseq
        %v1589 = vshrl.u32 %v1588, 7
        %v1590 = vsub.s32 0, %v1589
        %v1591 = vrot.slane %v1586, %v1590
        %v1593 = vadd.f32 %v1584, %v1591
        %v1594 = vadd.f32 %v1585, %v1591
        %v1595 = vmax.f32 %v1593, 0.0
        %v1596 = vmax.f32 %v1594, 0.0
        %v1597 = vpack.c.bf16 %v1596, %v1595
        %v1598 = vld [vmem:[%s881] sm:$0xf]
        %v1599 = vld [vmem:[%s881 + $0x4] sm:$0xf]
        %v1600 = vld [vmem:[%s881 + $0x8] sm:$0xf]
        %v1601 = vld [vmem:[%s881 + $0xc] sm:$0xf]
        %v1602 = vld [vmem:[%s881 + $0x10] sm:$0xf]
        %v1603 = vld [vmem:[%s881 + $0x14] sm:$0xf]
        %v1604 = vld [vmem:[%s881 + $0x18] sm:$0xf]
        %v1605 = vld [vmem:[%s881 + $0x1c] sm:$0xf]
        %v1606 = vld [vmem:[%s881 + $0x20] sm:$0xf]
        %v1607 = vld [vmem:[%s881 + $0x24] sm:$0xf]
        %v1608 = vld [vmem:[%s881 + $0x28] sm:$0xf]
        %v1609 = vld [vmem:[%s881 + $0x2c] sm:$0xf]
        %v1610 = vld [vmem:[%s881 + $0x30] sm:$0xf]
        %v1611 = vld [vmem:[%s881 + $0x34] sm:$0xf]
        %v1612 = vld [vmem:[%s881 + $0x38] sm:$0xf]
        %v1613 = vld [vmem:[%s881 + $0x3c] sm:$0xf]
        %v1614 = vld [vmem:[%s1031] sm:$0x1]
        %v1616 = vlaneseq
        %v1617 = vshrl.u32 %v1616, 7
        %v1618 = vsub.s32 0, %v1617
        %v1619 = vrot.slane %v1614, %v1618
        %v1637 = vunpack.c.l.b16 %v1598
        %v1638 = vunpack.c.l.b16 %v1599
        %v1639 = vunpack.c.l.b16 %v1600
        %v1640 = vunpack.c.l.b16 %v1601
        %v1641 = vunpack.c.l.b16 %v1602
        %v1642 = vunpack.c.l.b16 %v1603
        %v1643 = vunpack.c.l.b16 %v1604
        %v1644 = vunpack.c.l.b16 %v1605
        %v1645 = vunpack.c.l.b16 %v1606
        %v1646 = vunpack.c.l.b16 %v1607
        %v1647 = vunpack.c.l.b16 %v1608
        %v1648 = vunpack.c.l.b16 %v1609
        %v1649 = vunpack.c.l.b16 %v1610
        %v1650 = vunpack.c.l.b16 %v1611
        %v1651 = vunpack.c.l.b16 %v1612
        %v1652 = vunpack.c.l.b16 %v1613
        %v1653 = vpack.c.b16 %v1638, %v1637
        %v1654 = vpack.c.b16 %v1640, %v1639
        %v1655 = vpack.c.b16 %v1642, %v1641
        %v1656 = vpack.c.b16 %v1644, %v1643
        %v1657 = vpack.c.b16 %v1646, %v1645
        %v1658 = vpack.c.b16 %v1648, %v1647
        %v1659 = vpack.c.b16 %v1650, %v1649
        %v1660 = vpack.c.b16 %v1652, %v1651
        %1669 = vmatprep.subr.bf16.mxu0 0
        %1670 = vmatpush1.bf16.msra.mxu0 %v1660
        %1671 = vmatprep.subr.bf16.mxu0 0
        %1672 = vmatpush1.bf16.msra.mxu0 %v1659
        %1673 = vmatprep.subr.bf16.mxu0 0
        %1674 = vmatpush1.bf16.msra.mxu0 %v1658
        %1675 = vmatprep.subr.bf16.mxu0 0
        %1676 = vmatpush1.bf16.msra.mxu0 %v1657
        %1677 = vmatprep.subr.bf16.mxu0 0
        %1678 = vmatpush1.bf16.msra.mxu0 %v1656
        %1679 = vmatprep.subr.bf16.mxu0 0
        %1680 = vmatpush1.bf16.msra.mxu0 %v1655
        %1681 = vmatprep.subr.bf16.mxu0 0
        %1682 = vmatpush1.bf16.msra.mxu0 %v1654
        %1683 = vmatprep.subr.bf16.mxu0 0
        %1684 = vmatpush1.bf16.msra.mxu0 %v1653
        %1685 = vmatprep.subr.bf16.mxu0 0
        %1686 = vmatpush2.bf16.msra.mxu0 0
        %1687 = vmatprep.subr.bf16.mxu0 0
        %1688 = vmatpush2.bf16.msra.mxu0 0
        %1689 = vmatprep.subr.bf16.mxu0 0
        %1690 = vmatpush2.bf16.msra.mxu0 0
        %1691 = vmatprep.subr.bf16.mxu0 0
        %1692 = vmatpush2.bf16.msra.mxu0 0
        %1693 = vmatprep.subr.bf16.mxu0 0
        %1694 = vmatpush2.bf16.msra.mxu0 0
        %1695 = vmatprep.subr.bf16.mxu0 0
        %1696 = vmatpush2.bf16.msra.mxu0 0
        %1697 = vmatprep.subr.bf16.mxu0 0
        %1698 = vmatpush2.bf16.msra.mxu0 0
        %1699 = vmatprep.subr.bf16.mxu0 0
        %1700 = vmatpush2.bf16.msra.mxu0 0
        %1701 = vmatprep.mubr.bf16.mxu0 0
        %1702 = vmatmul.mubr.bf16.gmra.mxu0 %v1597
        %v1703 = vpop.f32.mrf.mxu0
        %v1704 = vadd.f32 %v1619, %v1703
        %v1705 = vpop.f32.mrf.mxu0
        %v1706 = vpop.f32.mrf.mxu0
        %v1707 = vadd.f32 %v1619, %v1706
        %v1708 = vpop.f32.mrf.mxu0
        %1709 = vdwg.mxu0
        %v1710 = vmax.f32 %v1704, 0.0
        %v1711 = vmax.f32 %v1707, 0.0
        %v1712 = vld [vmem:[%s890] sm:$0xf]
        %v1713 = vld [vmem:[%s890 + $0x4] sm:$0xf]
        %v1714 = vld [vmem:[%s890 + $0x8] sm:$0xf]
        %v1715 = vld [vmem:[%s890 + $0xc] sm:$0xf]
        %v1716 = vld [vmem:[%s890 + $0x10] sm:$0xf]
        %v1717 = vld [vmem:[%s890 + $0x14] sm:$0xf]
        %v1718 = vld [vmem:[%s890 + $0x18] sm:$0xf]
        %v1719 = vld [vmem:[%s890 + $0x1c] sm:$0xf]
        %v1720 = vld [vmem:[%s890 + $0x20] sm:$0xf]
        %v1721 = vld [vmem:[%s890 + $0x24] sm:$0xf]
        %v1722 = vld [vmem:[%s890 + $0x28] sm:$0xf]
        %v1723 = vld [vmem:[%s890 + $0x2c] sm:$0xf]
        %v1724 = vld [vmem:[%s890 + $0x30] sm:$0xf]
        %v1725 = vld [vmem:[%s890 + $0x34] sm:$0xf]
        %v1726 = vld [vmem:[%s890 + $0x38] sm:$0xf]
        %v1727 = vld [vmem:[%s890 + $0x3c] sm:$0xf]
        %v1728 = vld [vmem:[%s1034] sm:$0x1]
        %v1730 = vlaneseq
        %v1731 = vshrl.u32 %v1730, 7
        %v1732 = vsub.s32 0, %v1731
        %v1733 = vrot.slane %v1728, %v1732
        %v1751 = vunpack.c.l.b16 %v1712
        %v1752 = vunpack.c.l.b16 %v1713
        %v1753 = vunpack.c.l.b16 %v1714
        %v1754 = vunpack.c.l.b16 %v1715
        %v1755 = vunpack.c.l.b16 %v1716
        %v1756 = vunpack.c.l.b16 %v1717
        %v1757 = vunpack.c.l.b16 %v1718
        %v1758 = vunpack.c.l.b16 %v1719
        %v1759 = vunpack.c.l.b16 %v1720
        %v1760 = vunpack.c.l.b16 %v1721
        %v1761 = vunpack.c.l.b16 %v1722
        %v1762 = vunpack.c.l.b16 %v1723
        %v1763 = vunpack.c.l.b16 %v1724
        %v1764 = vunpack.c.l.b16 %v1725
        %v1765 = vunpack.c.l.b16 %v1726
        %v1766 = vunpack.c.l.b16 %v1727
        %v1767 = vpack.c.b16 %v1752, %v1751
        %v1768 = vpack.c.b16 %v1754, %v1753
        %v1769 = vpack.c.b16 %v1756, %v1755
        %v1770 = vpack.c.b16 %v1758, %v1757
        %v1771 = vpack.c.b16 %v1760, %v1759
        %v1772 = vpack.c.b16 %v1762, %v1761
        %v1773 = vpack.c.b16 %v1764, %v1763
        %v1774 = vpack.c.b16 %v1766, %v1765
        %1783 = vmatprep.subr.bf16.mxu0 0
        %1784 = vmatpush1.bf16.msra.mxu0 %v1774
        %1785 = vmatprep.subr.bf16.mxu0 0
        %1786 = vmatpush1.bf16.msra.mxu0 %v1773
        %1787 = vmatprep.subr.bf16.mxu0 0
        %1788 = vmatpush1.bf16.msra.mxu0 %v1772
        %1789 = vmatprep.subr.bf16.mxu0 0
        %1790 = vmatpush1.bf16.msra.mxu0 %v1771
        %1791 = vmatprep.subr.bf16.mxu0 0
        %1792 = vmatpush1.bf16.msra.mxu0 %v1770
        %1793 = vmatprep.subr.bf16.mxu0 0
        %1794 = vmatpush1.bf16.msra.mxu0 %v1769
        %1795 = vmatprep.subr.bf16.mxu0 0
        %1796 = vmatpush1.bf16.msra.mxu0 %v1768
        %1797 = vmatprep.subr.bf16.mxu0 0
        %1798 = vmatpush1.bf16.msra.mxu0 %v1767
        %1799 = vmatprep.subr.bf16.mxu0 0
        %1800 = vmatpush2.bf16.msra.mxu0 0
        %1801 = vmatprep.subr.bf16.mxu0 0
        %1802 = vmatpush2.bf16.msra.mxu0 0
        %1803 = vmatprep.subr.bf16.mxu0 0
        %1804 = vmatpush2.bf16.msra.mxu0 0
        %1805 = vmatprep.subr.bf16.mxu0 0
        %1806 = vmatpush2.bf16.msra.mxu0 0
        %1807 = vmatprep.subr.bf16.mxu0 0
        %1808 = vmatpush2.bf16.msra.mxu0 0
        %1809 = vmatprep.subr.bf16.mxu0 0
        %1810 = vmatpush2.bf16.msra.mxu0 0
        %1811 = vmatprep.subr.bf16.mxu0 0
        %1812 = vmatpush2.bf16.msra.mxu0 0
        %1813 = vmatprep.subr.bf16.mxu0 0
        %1814 = vmatpush2.bf16.msra.mxu0 0
        %1815 = vmatprep.mubr.bf16.mxu0 0
        %1816 = vmatmul.mubr.bf16.gmra.mxu0 %v1597
        %v1817 = vpop.f32.mrf.mxu0
        %v1818 = vadd.f32 %v1733, %v1817
        %v1819 = vpop.f32.mrf.mxu0
        %v1820 = vpop.f32.mrf.mxu0
        %v1821 = vadd.f32 %v1733, %v1820
        %v1822 = vpop.f32.mrf.mxu0
        %1823 = vdwg.mxu0
        %v1824 = vmax.f32 %v1818, 0.0
        %v1825 = vmax.f32 %v1821, 0.0
        %v1826 = vld [vmem:[%s899] sm:$0xf]
        %v1827 = vld [vmem:[%s899 + $0x4] sm:$0xf]
        %v1828 = vld [vmem:[%s899 + $0x8] sm:$0xf]
        %v1829 = vld [vmem:[%s899 + $0xc] sm:$0xf]
        %v1830 = vld [vmem:[%s899 + $0x10] sm:$0xf]
        %v1831 = vld [vmem:[%s899 + $0x14] sm:$0xf]
        %v1832 = vld [vmem:[%s899 + $0x18] sm:$0xf]
        %v1833 = vld [vmem:[%s899 + $0x1c] sm:$0xf]
        %v1834 = vld [vmem:[%s899 + $0x20] sm:$0xf]
        %v1835 = vld [vmem:[%s899 + $0x24] sm:$0xf]
        %v1836 = vld [vmem:[%s899 + $0x28] sm:$0xf]
        %v1837 = vld [vmem:[%s899 + $0x2c] sm:$0xf]
        %v1838 = vld [vmem:[%s899 + $0x30] sm:$0xf]
        %v1839 = vld [vmem:[%s899 + $0x34] sm:$0xf]
        %v1840 = vld [vmem:[%s899 + $0x38] sm:$0xf]
        %v1841 = vld [vmem:[%s899 + $0x3c] sm:$0xf]
        %v1842 = vld [vmem:[%s1037] sm:$0x1]
        %v1844 = vlaneseq
        %v1845 = vshrl.u32 %v1844, 7
        %v1846 = vsub.s32 0, %v1845
        %v1847 = vrot.slane %v1842, %v1846
        %v1865 = vunpack.c.l.b16 %v1826
        %v1866 = vunpack.c.l.b16 %v1827
        %v1867 = vunpack.c.l.b16 %v1828
        %v1868 = vunpack.c.l.b16 %v1829
        %v1869 = vunpack.c.l.b16 %v1830
        %v1870 = vunpack.c.l.b16 %v1831
        %v1871 = vunpack.c.l.b16 %v1832
        %v1872 = vunpack.c.l.b16 %v1833
        %v1873 = vunpack.c.l.b16 %v1834
        %v1874 = vunpack.c.l.b16 %v1835
        %v1875 = vunpack.c.l.b16 %v1836
        %v1876 = vunpack.c.l.b16 %v1837
        %v1877 = vunpack.c.l.b16 %v1838
        %v1878 = vunpack.c.l.b16 %v1839
        %v1879 = vunpack.c.l.b16 %v1840
        %v1880 = vunpack.c.l.b16 %v1841
        %v1881 = vpack.c.b16 %v1866, %v1865
        %v1882 = vpack.c.b16 %v1868, %v1867
        %v1883 = vpack.c.b16 %v1870, %v1869
        %v1884 = vpack.c.b16 %v1872, %v1871
        %v1885 = vpack.c.b16 %v1874, %v1873
        %v1886 = vpack.c.b16 %v1876, %v1875
        %v1887 = vpack.c.b16 %v1878, %v1877
        %v1888 = vpack.c.b16 %v1880, %v1879
        %1897 = vmatprep.subr.bf16.mxu0 0
        %1898 = vmatpush1.bf16.msra.mxu0 %v1888
        %1899 = vmatprep.subr.bf16.mxu0 0
        %1900 = vmatpush1.bf16.msra.mxu0 %v1887
        %1901 = vmatprep.subr.bf16.mxu0 0
        %1902 = vmatpush1.bf16.msra.mxu0 %v1886
        %1903 = vmatprep.subr.bf16.mxu0 0
        %1904 = vmatpush1.bf16.msra.mxu0 %v1885
        %1905 = vmatprep.subr.bf16.mxu0 0
        %1906 = vmatpush1.bf16.msra.mxu0 %v1884
        %1907 = vmatprep.subr.bf16.mxu0 0
        %1908 = vmatpush1.bf16.msra.mxu0 %v1883
        %1909 = vmatprep.subr.bf16.mxu0 0
        %1910 = vmatpush1.bf16.msra.mxu0 %v1882
        %1911 = vmatprep.subr.bf16.mxu0 0
        %1912 = vmatpush1.bf16.msra.mxu0 %v1881
        %1913 = vmatprep.subr.bf16.mxu0 0
        %1914 = vmatpush2.bf16.msra.mxu0 0
        %1915 = vmatprep.subr.bf16.mxu0 0
        %1916 = vmatpush2.bf16.msra.mxu0 0
        %1917 = vmatprep.subr.bf16.mxu0 0
        %1918 = vmatpush2.bf16.msra.mxu0 0
        %1919 = vmatprep.subr.bf16.mxu0 0
        %1920 = vmatpush2.bf16.msra.mxu0 0
        %1921 = vmatprep.subr.bf16.mxu0 0
        %1922 = vmatpush2.bf16.msra.mxu0 0
        %1923 = vmatprep.subr.bf16.mxu0 0
        %1924 = vmatpush2.bf16.msra.mxu0 0
        %1925 = vmatprep.subr.bf16.mxu0 0
        %1926 = vmatpush2.bf16.msra.mxu0 0
        %1927 = vmatprep.subr.bf16.mxu0 0
        %1928 = vmatpush2.bf16.msra.mxu0 0
        %1929 = vmatprep.mubr.bf16.mxu0 0
        %1930 = vmatmul.mubr.bf16.gmra.mxu0 %v1597
        %v1931 = vpop.f32.mrf.mxu0
        %v1932 = vadd.f32 %v1847, %v1931
        %v1933 = vpop.f32.mrf.mxu0
        %v1934 = vpop.f32.mrf.mxu0
        %v1935 = vadd.f32 %v1847, %v1934
        %v1936 = vpop.f32.mrf.mxu0
        %1937 = vdwg.mxu0
        %v1938 = vmax.f32 %v1932, 0.0
        %v1939 = vmax.f32 %v1935, 0.0
        %vm1940 = vcmask 130048
        %v1942 = vsel %vm1940, %v1105, 0
        %1944 = vmatprep.subr.mxu0 0.0
        %1945 = vmatpush1.msra.mxu0 0.0
        %1946 = vmatprep.subr.mxu0 0.0
        %1947 = vmatpush1.msra.mxu0 0.0
        %1948 = vmatprep.subr.mxu0 0.0
        %1949 = vmatpush1.msra.mxu0 0.0
        %1950 = vmatprep.subr.mxu0 0.0
        %1951 = vmatpush1.msra.mxu0 0.0
        %1952 = vmatprep.subr.mxu0 0.0
        %1953 = vmatpush1.msra.mxu0 0.0
        %1954 = vmatprep.subr.mxu0 0.0
        %1955 = vmatpush1.msra.mxu0 0.0
        %1956 = vmatprep.subr.mxu0 0.0
        %1957 = vmatpush1.msra.mxu0 0.0
        %1958 = vmatprep.subr.mxu0 0.0
        %1959 = vmatpush1.msra.mxu0 0.0
        %1960 = vmatprep.subr.mxu0 0.0
        %1961 = vmatpush1.msra.mxu0 0.0
        %1962 = vmatprep.subr.mxu0 0.0
        %1963 = vmatpush1.msra.mxu0 0.0
        %1964 = vmatprep.subr.mxu0 0.0
        %1965 = vmatpush1.msra.mxu0 0.0
        %1966 = vmatprep.subr.mxu0 0.0
        %1967 = vmatpush1.msra.mxu0 0.0
        %1968 = vmatprep.subr.mxu0 0.0
        %1969 = vmatpush1.msra.mxu0 0.0
        %1970 = vmatprep.subr.mxu0 0.0
        %1971 = vmatpush1.msra.mxu0 0.0
        %1972 = vmatprep.subr.mxu0 0.0
        %1973 = vmatpush1.msra.mxu0 %v1939
        %1974 = vmatprep.subr.mxu0 0.0
        %1975 = vmatpush1.msra.mxu0 %v1938
        %1976 = vmatprep.subr.mxu0 0.0
        %1977 = vmatpush2.msra.mxu0 0.0
        %1978 = vmatprep.subr.mxu0 0.0
        %1979 = vmatpush2.msra.mxu0 0.0
        %1980 = vmatprep.subr.mxu0 0.0
        %1981 = vmatpush2.msra.mxu0 0.0
        %1982 = vmatprep.subr.mxu0 0.0
        %1983 = vmatpush2.msra.mxu0 0.0
        %1984 = vmatprep.subr.mxu0 0.0
        %1985 = vmatpush2.msra.mxu0 0.0
        %1986 = vmatprep.subr.mxu0 0.0
        %1987 = vmatpush2.msra.mxu0 0.0
        %1988 = vmatprep.subr.mxu0 0.0
        %1989 = vmatpush2.msra.mxu0 0.0
        %1990 = vmatprep.subr.mxu0 0.0
        %1991 = vmatpush2.msra.mxu0 0.0
        %1992 = vmatprep.subr.mxu0 0.0
        %1993 = vmatpush2.msra.mxu0 0.0
        %1994 = vmatprep.subr.mxu0 0.0
        %1995 = vmatpush2.msra.mxu0 0.0
        %1996 = vmatprep.subr.mxu0 0.0
        %1997 = vmatpush2.msra.mxu0 0.0
        %1998 = vmatprep.subr.mxu0 0.0
        %1999 = vmatpush2.msra.mxu0 0.0
        %2000 = vmatprep.subr.mxu0 0.0
        %2001 = vmatpush2.msra.mxu0 0.0
        %2002 = vmatprep.subr.mxu0 0.0
        %2003 = vmatpush2.msra.mxu0 0.0
        %2004 = vmatprep.subr.mxu0 0.0
        %2005 = vmatpush2.msra.mxu0 0.0
        %2006 = vmatprep.subr.mxu0 0.0
        %2007 = vmatpush2.msra.mxu0 0.0
        %2008 = vmatprep.mubr.f32.mxu0 0.0
        %2009 = vmatmul.mubr.f32.gmra.mxu0 %v1942
        %v2010 = vpop.f32.mrf.mxu0
        %v2011 = vadd.f32 0.0, %v2010
        %v2012 = vpop.f32.mrf.mxu0
        %2013 = vdwg.mxu0
        %v2015 = vsel %vm1940, %v1097, 0
        %2017 = vmatprep.subr.mxu0 0.0
        %2018 = vmatpush1.msra.mxu0 0.0
        %2019 = vmatprep.subr.mxu0 0.0
        %2020 = vmatpush1.msra.mxu0 0.0
        %2021 = vmatprep.subr.mxu0 0.0
        %2022 = vmatpush1.msra.mxu0 0.0
        %2023 = vmatprep.subr.mxu0 0.0
        %2024 = vmatpush1.msra.mxu0 0.0
        %2025 = vmatprep.subr.mxu0 0.0
        %2026 = vmatpush1.msra.mxu0 0.0
        %2027 = vmatprep.subr.mxu0 0.0
        %2028 = vmatpush1.msra.mxu0 0.0
        %2029 = vmatprep.subr.mxu0 0.0
        %2030 = vmatpush1.msra.mxu0 0.0
        %2031 = vmatprep.subr.mxu0 0.0
        %2032 = vmatpush1.msra.mxu0 0.0
        %2033 = vmatprep.subr.mxu0 0.0
        %2034 = vmatpush1.msra.mxu0 0.0
        %2035 = vmatprep.subr.mxu0 0.0
        %2036 = vmatpush1.msra.mxu0 0.0
        %2037 = vmatprep.subr.mxu0 0.0
        %2038 = vmatpush1.msra.mxu0 0.0
        %2039 = vmatprep.subr.mxu0 0.0
        %2040 = vmatpush1.msra.mxu0 0.0
        %2041 = vmatprep.subr.mxu0 0.0
        %2042 = vmatpush1.msra.mxu0 0.0
        %2043 = vmatprep.subr.mxu0 0.0
        %2044 = vmatpush1.msra.mxu0 0.0
        %2045 = vmatprep.subr.mxu0 0.0
        %2046 = vmatpush1.msra.mxu0 %v1711
        %2047 = vmatprep.subr.mxu0 0.0
        %2048 = vmatpush1.msra.mxu0 %v1710
        %2049 = vmatprep.subr.mxu0 0.0
        %2050 = vmatpush2.msra.mxu0 0.0
        %2051 = vmatprep.subr.mxu0 0.0
        %2052 = vmatpush2.msra.mxu0 0.0
        %2053 = vmatprep.subr.mxu0 0.0
        %2054 = vmatpush2.msra.mxu0 0.0
        %2055 = vmatprep.subr.mxu0 0.0
        %2056 = vmatpush2.msra.mxu0 0.0
        %2057 = vmatprep.subr.mxu0 0.0
        %2058 = vmatpush2.msra.mxu0 0.0
        %2059 = vmatprep.subr.mxu0 0.0
        %2060 = vmatpush2.msra.mxu0 0.0
        %2061 = vmatprep.subr.mxu0 0.0
        %2062 = vmatpush2.msra.mxu0 0.0
        %2063 = vmatprep.subr.mxu0 0.0
        %2064 = vmatpush2.msra.mxu0 0.0
        %2065 = vmatprep.subr.mxu0 0.0
        %2066 = vmatpush2.msra.mxu0 0.0
        %2067 = vmatprep.subr.mxu0 0.0
        %2068 = vmatpush2.msra.mxu0 0.0
        %2069 = vmatprep.subr.mxu0 0.0
        %2070 = vmatpush2.msra.mxu0 0.0
        %2071 = vmatprep.subr.mxu0 0.0
        %2072 = vmatpush2.msra.mxu0 0.0
        %2073 = vmatprep.subr.mxu0 0.0
        %2074 = vmatpush2.msra.mxu0 0.0
        %2075 = vmatprep.subr.mxu0 0.0
        %2076 = vmatpush2.msra.mxu0 0.0
        %2077 = vmatprep.subr.mxu0 0.0
        %2078 = vmatpush2.msra.mxu0 0.0
        %2079 = vmatprep.subr.mxu0 0.0
        %2080 = vmatpush2.msra.mxu0 0.0
        %2081 = vmatprep.mubr.f32.mxu0 0.0
        %2082 = vmatmul.mubr.f32.gmra.mxu0 %v2015
        %v2083 = vpop.f32.mrf.mxu0
        %v2084 = vadd.f32 %v2011, %v2083
        %v2085 = vpop.f32.mrf.mxu0
        %2086 = vdwg.mxu0
        %v2087 = vld [vmem:[%s4] sm:$0xff]
        %2089 = vset.pattern.permute.xlu0 0
        %2090 = vperm.xlu0 %2089, %v2087
        %v2091 = vpop.permute.xlu0 %2090
        %v2093 = vmul.f32 %v2084, %v2091
        %v2094 = vpack.c.bf16 %v2093, %v2093
        %v2095 = vld [vmem:[%s908] sm:$0xf]
        %v2096 = vld [vmem:[%s908 + $0x4] sm:$0xf]
        %v2097 = vld [vmem:[%s908 + $0x8] sm:$0xf]
        %v2098 = vld [vmem:[%s908 + $0xc] sm:$0xf]
        %v2099 = vld [vmem:[%s908 + $0x10] sm:$0xf]
        %v2100 = vld [vmem:[%s908 + $0x14] sm:$0xf]
        %v2101 = vld [vmem:[%s908 + $0x18] sm:$0xf]
        %v2102 = vld [vmem:[%s908 + $0x1c] sm:$0xf]
        %v2103 = vld [vmem:[%s908 + $0x20] sm:$0xf]
        %v2104 = vld [vmem:[%s908 + $0x24] sm:$0xf]
        %v2105 = vld [vmem:[%s908 + $0x28] sm:$0xf]
        %v2106 = vld [vmem:[%s908 + $0x2c] sm:$0xf]
        %v2107 = vld [vmem:[%s908 + $0x30] sm:$0xf]
        %v2108 = vld [vmem:[%s908 + $0x34] sm:$0xf]
        %v2109 = vld [vmem:[%s908 + $0x38] sm:$0xf]
        %v2110 = vld [vmem:[%s908 + $0x3c] sm:$0xf]
        %v2111 = vld [vmem:[%s1040] sm:$0x1]
        %v2113 = vlaneseq
        %v2114 = vshrl.u32 %v2113, 7
        %v2115 = vsub.s32 0, %v2114
        %v2116 = vrot.slane %v2111, %v2115
        %v2134 = vunpack.c.l.b16 %v2095
        %v2135 = vunpack.c.l.b16 %v2096
        %v2136 = vunpack.c.l.b16 %v2097
        %v2137 = vunpack.c.l.b16 %v2098
        %v2138 = vunpack.c.l.b16 %v2099
        %v2139 = vunpack.c.l.b16 %v2100
        %v2140 = vunpack.c.l.b16 %v2101
        %v2141 = vunpack.c.l.b16 %v2102
        %v2142 = vunpack.c.l.b16 %v2103
        %v2143 = vunpack.c.l.b16 %v2104
        %v2144 = vunpack.c.l.b16 %v2105
        %v2145 = vunpack.c.l.b16 %v2106
        %v2146 = vunpack.c.l.b16 %v2107
        %v2147 = vunpack.c.l.b16 %v2108
        %v2148 = vunpack.c.l.b16 %v2109
        %v2149 = vunpack.c.l.b16 %v2110
        %v2150 = vpack.c.b16 %v2135, %v2134
        %v2151 = vpack.c.b16 %v2137, %v2136
        %v2152 = vpack.c.b16 %v2139, %v2138
        %v2153 = vpack.c.b16 %v2141, %v2140
        %v2154 = vpack.c.b16 %v2143, %v2142
        %v2155 = vpack.c.b16 %v2145, %v2144
        %v2156 = vpack.c.b16 %v2147, %v2146
        %v2157 = vpack.c.b16 %v2149, %v2148
        %2166 = vmatprep.subr.bf16.mxu0 0
        %2167 = vmatpush1.bf16.msra.mxu0 %v2157
        %2168 = vmatprep.subr.bf16.mxu0 0
        %2169 = vmatpush1.bf16.msra.mxu0 %v2156
        %2170 = vmatprep.subr.bf16.mxu0 0
        %2171 = vmatpush1.bf16.msra.mxu0 %v2155
        %2172 = vmatprep.subr.bf16.mxu0 0
        %2173 = vmatpush1.bf16.msra.mxu0 %v2154
        %2174 = vmatprep.subr.bf16.mxu0 0
        %2175 = vmatpush1.bf16.msra.mxu0 %v2153
        %2176 = vmatprep.subr.bf16.mxu0 0
        %2177 = vmatpush1.bf16.msra.mxu0 %v2152
        %2178 = vmatprep.subr.bf16.mxu0 0
        %2179 = vmatpush1.bf16.msra.mxu0 %v2151
        %2180 = vmatprep.subr.bf16.mxu0 0
        %2181 = vmatpush1.bf16.msra.mxu0 %v2150
        %2182 = vmatprep.subr.bf16.mxu0 0
        %2183 = vmatpush2.bf16.msra.mxu0 0
        %2184 = vmatprep.subr.bf16.mxu0 0
        %2185 = vmatpush2.bf16.msra.mxu0 0
        %2186 = vmatprep.subr.bf16.mxu0 0
        %2187 = vmatpush2.bf16.msra.mxu0 0
        %2188 = vmatprep.subr.bf16.mxu0 0
        %2189 = vmatpush2.bf16.msra.mxu0 0
        %2190 = vmatprep.subr.bf16.mxu0 0
        %2191 = vmatpush2.bf16.msra.mxu0 0
        %2192 = vmatprep.subr.bf16.mxu0 0
        %2193 = vmatpush2.bf16.msra.mxu0 0
        %2194 = vmatprep.subr.bf16.mxu0 0
        %2195 = vmatpush2.bf16.msra.mxu0 0
        %2196 = vmatprep.subr.bf16.mxu0 0
        %2197 = vmatpush2.bf16.msra.mxu0 0
        %2198 = vmatprep.mubr.bf16.mxu0 0
        %2199 = vmatmul.mubr.bf16.gmra.mxu0 %v2094
        %v2200 = vpop.f32.mrf.mxu0
        %v2201 = vadd.f32 %v2116, %v2200
        %v2202 = vpop.f32.mrf.mxu0
        %v2203 = vpop.f32.mrf.mxu0
        %v2204 = vpop.f32.mrf.mxu0
        %2205 = vdwg.mxu0
        %v2206 = vmax.f32 %v2201, 0.0
        %v2207 = vpack.c.bf16 %v2206, %v2206
        %v2208 = vld [vmem:[%s917] sm:$0xf]
        %v2209 = vld [vmem:[%s917 + $0x4] sm:$0xf]
        %v2210 = vld [vmem:[%s917 + $0x8] sm:$0xf]
        %v2211 = vld [vmem:[%s917 + $0xc] sm:$0xf]
        %v2212 = vld [vmem:[%s917 + $0x10] sm:$0xf]
        %v2213 = vld [vmem:[%s917 + $0x14] sm:$0xf]
        %v2214 = vld [vmem:[%s917 + $0x18] sm:$0xf]
        %v2215 = vld [vmem:[%s917 + $0x1c] sm:$0xf]
        %v2216 = vld [vmem:[%s917 + $0x20] sm:$0xf]
        %v2217 = vld [vmem:[%s917 + $0x24] sm:$0xf]
        %v2218 = vld [vmem:[%s917 + $0x28] sm:$0xf]
        %v2219 = vld [vmem:[%s917 + $0x2c] sm:$0xf]
        %v2220 = vld [vmem:[%s917 + $0x30] sm:$0xf]
        %v2221 = vld [vmem:[%s917 + $0x34] sm:$0xf]
        %v2222 = vld [vmem:[%s917 + $0x38] sm:$0xf]
        %v2223 = vld [vmem:[%s917 + $0x3c] sm:$0xf]
        %v2224 = vld [vmem:[%s1043] sm:$0x1]
        %v2226 = vlaneseq
        %v2227 = vshrl.u32 %v2226, 7
        %v2228 = vsub.s32 0, %v2227
        %v2229 = vrot.slane %v2224, %v2228
        %v2247 = vunpack.c.l.b16 %v2208
        %v2248 = vunpack.c.l.b16 %v2209
        %v2249 = vunpack.c.l.b16 %v2210
        %v2250 = vunpack.c.l.b16 %v2211
        %v2251 = vunpack.c.l.b16 %v2212
        %v2252 = vunpack.c.l.b16 %v2213
        %v2253 = vunpack.c.l.b16 %v2214
        %v2254 = vunpack.c.l.b16 %v2215
        %v2255 = vunpack.c.l.b16 %v2216
        %v2256 = vunpack.c.l.b16 %v2217
        %v2257 = vunpack.c.l.b16 %v2218
        %v2258 = vunpack.c.l.b16 %v2219
        %v2259 = vunpack.c.l.b16 %v2220
        %v2260 = vunpack.c.l.b16 %v2221
        %v2261 = vunpack.c.l.b16 %v2222
        %v2262 = vunpack.c.l.b16 %v2223
        %v2263 = vpack.c.b16 %v2248, %v2247
        %v2264 = vpack.c.b16 %v2250, %v2249
        %v2265 = vpack.c.b16 %v2252, %v2251
        %v2266 = vpack.c.b16 %v2254, %v2253
        %v2267 = vpack.c.b16 %v2256, %v2255
        %v2268 = vpack.c.b16 %v2258, %v2257
        %v2269 = vpack.c.b16 %v2260, %v2259
        %v2270 = vpack.c.b16 %v2262, %v2261
        %2279 = vmatprep.subr.bf16.mxu0 0
        %2280 = vmatpush1.bf16.msra.mxu0 %v2270
        %2281 = vmatprep.subr.bf16.mxu0 0
        %2282 = vmatpush1.bf16.msra.mxu0 %v2269
        %2283 = vmatprep.subr.bf16.mxu0 0
        %2284 = vmatpush1.bf16.msra.mxu0 %v2268
        %2285 = vmatprep.subr.bf16.mxu0 0
        %2286 = vmatpush1.bf16.msra.mxu0 %v2267
        %2287 = vmatprep.subr.bf16.mxu0 0
        %2288 = vmatpush1.bf16.msra.mxu0 %v2266
        %2289 = vmatprep.subr.bf16.mxu0 0
        %2290 = vmatpush1.bf16.msra.mxu0 %v2265
        %2291 = vmatprep.subr.bf16.mxu0 0
        %2292 = vmatpush1.bf16.msra.mxu0 %v2264
        %2293 = vmatprep.subr.bf16.mxu0 0
        %2294 = vmatpush1.bf16.msra.mxu0 %v2263
        %2295 = vmatprep.subr.bf16.mxu0 0
        %2296 = vmatpush2.bf16.msra.mxu0 0
        %2297 = vmatprep.subr.bf16.mxu0 0
        %2298 = vmatpush2.bf16.msra.mxu0 0
        %2299 = vmatprep.subr.bf16.mxu0 0
        %2300 = vmatpush2.bf16.msra.mxu0 0
        %2301 = vmatprep.subr.bf16.mxu0 0
        %2302 = vmatpush2.bf16.msra.mxu0 0
        %2303 = vmatprep.subr.bf16.mxu0 0
        %2304 = vmatpush2.bf16.msra.mxu0 0
        %2305 = vmatprep.subr.bf16.mxu0 0
        %2306 = vmatpush2.bf16.msra.mxu0 0
        %2307 = vmatprep.subr.bf16.mxu0 0
        %2308 = vmatpush2.bf16.msra.mxu0 0
        %2309 = vmatprep.subr.bf16.mxu0 0
        %2310 = vmatpush2.bf16.msra.mxu0 0
        %2311 = vmatprep.mubr.bf16.mxu0 0
        %2312 = vmatmul.mubr.bf16.gmra.mxu0 %v2207
        %v2313 = vpop.f32.mrf.mxu0
        %v2314 = vadd.f32 %v2229, %v2313
        %v2315 = vpop.f32.mrf.mxu0
        %v2316 = vpop.f32.mrf.mxu0
        %v2317 = vpop.f32.mrf.mxu0
        %2318 = vdwg.mxu0
        %v2319 = vmax.f32 %v2314, 0.0
        %2320 = vst [vmem:[#allocation2] sm:$0xff] %v2319
        %2321 = vst [vmem:[#allocation3] sm:$0xff] %v1824
        %2322 = vst [vmem:[#allocation3 + $0x8] sm:$0xff] %v1825
        %2323 = vst [vmem:[#allocation18] sm:$0xff] %v2319
        %2324 = vst [vmem:[#allocation19] sm:$0xff] %v1824
        %2325 = vst [vmem:[#allocation19 + $0x8] sm:$0xff] %v1825
        // Predicated region
        $region141: #{tpu_custom_call.1} parent=103 // pred_check
          %p2326 = pneg %p575
        $region142: #{tpu_custom_call.1} parent=103 // pred_check_branch
          %2328 = sbr.rel (%p2326) target = $region144
        $region143: #{tpu_custom_call.1} parent=103 // pred_region
          %s2330 = ssub.s32 128, 128
          %2331 = vsyncadd [#allocation6], %s2330
          %s2333 = sshll.u32 [#allocation18], 4
          %s2334 = int_to_ptr.vmem [resolvable:$true] %s2333
          %2336 = dma.vmem_to_hbm [thread:$0]  %s2334, 128, %s21, [#allocation6]
        $region144: #{tpu_custom_call.1} parent=103 // pred_fallthru
          _
        // Predicated region
        $region145: #{tpu_custom_call.1} parent=103 // pred_check
          %p2337 = pneg %p596
        $region146: #{tpu_custom_call.1} parent=103 // pred_check_branch
          %2339 = sbr.rel (%p2337) target = $region148
        $region147: #{tpu_custom_call.1} parent=103 // pred_region
          %s2341 = ssub.s32 256, 256
          %2342 = vsyncadd [#allocation20], %s2341
          %s2343 = sshll.u32 [#allocation19], 4
          %s2344 = int_to_ptr.vmem [resolvable:$true] %s2343
          %2349 = dma.vmem_to_hbm [thread:$0]  %s2344, 256, %s22, [#allocation20], 128, 128, 8
        $region148: #{tpu_custom_call.1} parent=103 // pred_fallthru
          _
        // Predicated region
        $region149: #{tpu_custom_call.1} parent=103 // pred_check
          %p2350 = pneg %p575
        $region150: #{tpu_custom_call.1} parent=103 // pred_check_branch
          %2352 = sbr.rel (%p2350) target = $region152
        $region151: #{tpu_custom_call.1} parent=103 // pred_region
          %2353 = dma.done [#allocation6], 128
        $region152: #{tpu_custom_call.1} parent=103 // pred_fallthru
          _
        // Predicated region
        $region153: #{tpu_custom_call.1} parent=103 // pred_check
          %p2354 = pneg %p596
        $region154: #{tpu_custom_call.1} parent=103 // pred_check_branch
          %2356 = sbr.rel (%p2354) target = $region156
        $region155: #{tpu_custom_call.1} parent=103 // pred_region
          %2357 = dma.done [#allocation20], 256
        $region156: #{tpu_custom_call.1} parent=103 // pred_fallthru
          _
      $region104: #{tpu_custom_call.1} parent=5 // pred_fallthru
        _
      %p2358 = scmp.le.s32.totalorder 2, %s46
      // Predicated region
      $region157: #{tpu_custom_call.1} parent=5 // pred_check
        %p2359 = pneg %p2358
      $region158: #{tpu_custom_call.1} parent=5 // pred_check_branch
        %2361 = sbr.rel (%p2359) target = $region160
      $region159: #{tpu_custom_call.1} parent=5 // pred_region
        %s2362 = ssub.s32 %s46, 2
      $region160: #{tpu_custom_call.1} parent=5 // pred_fallthru
        _
    $region6: #{tpu_custom_call.1} parent=1 // loop_footer
      %s50 = sadd.s32 1, %s46
    $region7: #{tpu_custom_call.1} parent=1 // loop_footer_branch
      %45 = sbr.rel target = $region3
    $region8: #{tpu_custom_call.1} parent=1 // loop_exit
      _
    %2363 = vsyncpa [#allocation5], 1
    %s2364 = scalar_lea.sflag [#allocation5], 1
    %2365 = vsyncpa %s2364, 1
    %2366 = vsyncpa [#allocation8], 1
    %s2367 = scalar_lea.sflag [#allocation8], 1
    %2368 = vsyncpa %s2367, 1
    %2369 = vsyncpa [#allocation11], 1
    %s2370 = scalar_lea.sflag [#allocation11], 1
    %2371 = vsyncpa %s2370, 1
    %2372 = vsyncpa [#allocation14], 1
    %s2373 = scalar_lea.sflag [#allocation14], 1
    %2374 = vsyncpa %s2373, 1
    %2375 = vsyncpa [#allocation17], 1
    %s2376 = scalar_lea.sflag [#allocation17], 1
    %2377 = vsyncpa %s2376, 1
    %2378 = vsyncpa [#allocation6], 1
    %s2379 = scalar_lea.sflag [#allocation6], 1
    %2380 = vsyncpa %s2379, 1
    %2381 = vsyncpa [#allocation20], 1

</llo_original>
